<compile_context>
chip_gen: v6e
topology: v6e:2x2x1
jax: 0.10.0
libtpu: 0.0.40
codegen_flags: <defaults>
</compile_context>

<pallas_src>
import functools

import jax
import jax.numpy as jnp
from jax.experimental import pallas as pl
from jax.experimental.pallas import tpu as pltpu

CIN = 64 * 2     # 128 input channels
COUT = 64        # output channels
LANE = 128       # TPU lane width
BN_EPS = 1e-5


def _base_learner_kernel(x_ref, w_ref, g_ref, beta_ref, o_ref,
                         sum_ref, sumsq_ref, scale_ref, shift_ref,
                         *opt_ycache, inv_m, bb, nl, tl, use_ycache):
    """Two-phase fused conv1x1 + BatchNorm(train) + ReLU.

    x_ref:     (bb, CIN, tl)   input tile (channel-major, lane-dense)
    w_ref:     (COUT, CIN)     conv weight (resident)
    g_ref:     (COUT, 1)       BN gamma
    beta_ref:  (COUT, 1)       BN beta
    o_ref:     (bb, COUT, tl)  output tile (only written in phase 1)
    sum_ref:   (COUT, LANE)    lane-dense per-channel partial sums
    sumsq_ref: (COUT, LANE)    lane-dense per-channel partial sums of squares
    scale_ref: (COUT, 1)       fused BN scale = gamma * rsqrt(var + eps)
    shift_ref: (COUT, 1)       fused BN shift = beta - mean * scale
    opt_ycache: optional (B*nl, COUT, tl) persistent VMEM cache of the conv output
    """
    phase = pl.program_id(0)
    b = pl.program_id(1)
    l = pl.program_id(2)
    is_first = jnp.logical_and(b == 0, l == 0)
    n_chunks = tl // LANE
    w = w_ref[...]

    @pl.when(phase == 0)
    def _stats_phase():
        @pl.when(is_first)
        def _init():
            sum_ref[...] = jnp.zeros_like(sum_ref)
            sumsq_ref[...] = jnp.zeros_like(sumsq_ref)

        s_acc = jnp.zeros((COUT, LANE), jnp.float32)
        ss_acc = jnp.zeros((COUT, LANE), jnp.float32)
        for bi in range(bb):
            # Pointwise Conv1d == channel matmul on the MXU.  Conv bias omitted:
            # it is cancelled exactly by the BN mean subtraction.  Any dtype cast
            # happens on-tile (never as an extra HBM pass in the wrapper).
            y_bi = jnp.dot(w, x_ref[bi].astype(jnp.float32),
                           preferred_element_type=jnp.float32)
            if use_ycache:
                opt_ycache[0][(b * bb + bi) * nl + l] = y_bi
            # Lane-dense stats: 128-lane partial sums via aligned static slices
            # (pure VPU adds); the cross-lane XLU reduce happens once at finalize.
            for c in range(n_chunks):
                blk = y_bi[:, c * LANE:(c + 1) * LANE]
                s_acc = s_acc + blk
                ss_acc = ss_acc + blk * blk
        sum_ref[...] += s_acc
        sumsq_ref[...] += ss_acc

    @pl.when(phase == 1)
    def _normalize_phase():
        @pl.when(is_first)
        def _finalize_stats():
            # TODO(synk): one-pass E[y^2]-mean^2 in f32 can lose accuracy when B*L
            # is very large; switch to shifted/compensated partial sums then.
            s = jnp.sum(sum_ref[...], axis=1, keepdims=True)
            ss = jnp.sum(sumsq_ref[...], axis=1, keepdims=True)
            mean = s * inv_m
            var = jnp.maximum(ss * inv_m - mean * mean, 0.0)
            scale = g_ref[...] * jax.lax.rsqrt(var + BN_EPS)
            scale_ref[...] = scale
            shift_ref[...] = beta_ref[...] - mean * scale

        scale = scale_ref[...]
        shift = shift_ref[...]
        for bi in range(bb):
            if use_ycache:
                # Conv output comes straight from VMEM; x is never re-read from HBM.
                y_bi = opt_ycache[0][(b * bb + bi) * nl + l]
            else:
                y_bi = jnp.dot(w, x_ref[bi].astype(jnp.float32),
                               preferred_element_type=jnp.float32)
            # Fused BN affine + ReLU: mul, add, max per element (VPU).
            o_ref[bi] = jnp.maximum(y_bi * scale + shift, 0.0)


def _pick_tile_l(lp, max_tl=2048):
    """Largest multiple-of-128 divisor of lp that is <= max_tl (lp itself if small)."""
    if lp <= max_tl:
        return lp
    t = max_tl
    while t >= LANE:
        if lp % t == 0:
            return t
        t -= LANE
    return LANE


def _pick_batch_block(batch, tl, target_lanes=2048, max_bb=8):
    """Largest divisor of batch (<= max_bb) so bb*tl amortizes per-grid-step overhead."""
    want = max(1, min(max_bb, target_lanes // tl if tl < target_lanes else 1))
    bb = 1
    for d in range(1, min(batch, want) + 1):
        if batch % d == 0:
            bb = d
    return bb


def _physical_vmem_bytes():
    # Generation-aware budget: 128 MiB on v5e/v6e, 64 MiB on v7x; conservative
    # (v7x-safe) default if the query is unavailable.
    try:
        return int(pltpu.get_tpu_info().vmem_capacity_bytes)
    except Exception:
        return 64 << 20


def base_learner_forward(x, conv_w, conv_b, bn_gamma, bn_beta):
    """x: (B, 128, L) -> relu(batchnorm_train(conv1d_k1(x))): (B, 64, L) f32."""
    del conv_b  # cancelled exactly by the training-mode BN mean subtraction
    B, cin, L = x.shape
    assert cin == CIN, f"expected {CIN} input channels, got {cin}"

    # Keep x in its native dtype (f32 or bf16); any cast happens inside the kernel.
    if x.dtype not in (jnp.float32, jnp.bfloat16):
        x = x.astype(jnp.float32)

    # Pad L to a lane multiple so every tile is lane-dense.  Exact: with the conv
    # bias dropped, padded columns contribute y == 0 to both BN sums, and inv_m
    # uses the true element count B*L.
    lp = ((L + LANE - 1) // LANE) * LANE
    if lp != L:
        x = jnp.pad(x, ((0, 0), (0, 0), (0, lp - L)))

    tl = _pick_tile_l(lp)
    nl = lp // tl
    bb = _pick_batch_block(B, tl)
    nb = B // bb
    inv_m = 1.0 / float(B * L)

    w = conv_w[:, :, 0].astype(jnp.float32)              # (COUT, CIN) -- no transpose
    g = bn_gamma.reshape(COUT, 1).astype(jnp.float32)
    beta = bn_beta.reshape(COUT, 1).astype(jnp.float32)

    # --- VMEM budgeting ------------------------------------------------------
    xbytes = 2 if x.dtype == jnp.bfloat16 else 4
    x_tile = bb * CIN * tl * xbytes
    o_tile = bb * COUT * tl * 4
    resident = COUT * CIN * 4 + 4 * COUT * 4 + 2 * COUT * LANE * 4
    base_need = 2 * (x_tile + o_tile) + resident + (1 << 20)  # double-buffered tiles
    ycache_bytes = B * nl * COUT * tl * 4
    cap = _physical_vmem_bytes()
    # Cache the conv output across phases only if it comfortably fits (half the
    # physical VMEM): phase 1 then never touches x in HBM and never re-runs the
    # matmul.  Otherwise fall back to re-reading x in phase 1.
    use_ycache = (base_need + ycache_bytes) <= cap // 2
    # TODO(synk): when the cache does not fit, a bf16 HBM y-intermediate would
    # still cut traffic ~20%; not implemented here (falls back to re-reading x).
    needed = base_need + (ycache_bytes if use_ycache else 0)
    vmem_limit = int(min(cap - (4 << 20), max(2 * needed, 32 << 20)))

    if use_ycache:
        # Phase 1 pins the x block index to (0,0,0): no new x DMAs are issued.
        x_map = lambda p, b, l: (b * (1 - p), 0, l * (1 - p))
    else:
        x_map = lambda p, b, l: (b, 0, l)

    scratch = [
        pltpu.VMEM((COUT, LANE), jnp.float32),   # per-channel partial sums
        pltpu.VMEM((COUT, LANE), jnp.float32),   # per-channel partial sums of squares
        pltpu.VMEM((COUT, 1), jnp.float32),      # fused BN scale
        pltpu.VMEM((COUT, 1), jnp.float32),      # fused BN shift
    ]
    if use_ycache:
        scratch.append(pltpu.VMEM((B * nl, COUT, tl), jnp.float32))  # conv-output cache

    kernel = functools.partial(_base_learner_kernel, inv_m=inv_m, bb=bb, nl=nl,
                               tl=tl, use_ycache=use_ycache)

    out = pl.pallas_call(
        kernel,
        out_shape=jax.ShapeDtypeStruct((B, COUT, lp), jnp.float32),
        grid=(2, nb, nl),   # (phase, batch-block, L-tile); phase 0 = stats, 1 = normalize
        in_specs=[
            pl.BlockSpec((bb, CIN, tl), x_map),                   # x tile
            pl.BlockSpec((COUT, CIN), lambda p, b, l: (0, 0)),    # conv weight (resident)
            pl.BlockSpec((COUT, 1), lambda p, b, l: (0, 0)),      # gamma
            pl.BlockSpec((COUT, 1), lambda p, b, l: (0, 0)),      # beta
        ],
        # Phase 0 pins the output block index to (0,0,0), so no unwritten tile
        # changes index mid-phase; phase 1 then walks and fully writes every
        # output tile exactly once (last write wins even if a stale block were
        # ever flushed early), so the result is correct either way.
        # TODO(synk): on v7x, split the normalize phase into its own pallas_call
        # with ("parallel","parallel") semantics to use both TensorCores (needs
        # an HBM y intermediate instead of the VMEM cache).
        out_specs=pl.BlockSpec((bb, COUT, tl), lambda p, b, l: (b * p, 0, l * p)),
        scratch_shapes=scratch,
        compiler_params=pltpu.CompilerParams(
            # Phase axis is sequential; b / l accumulate into shared scratch in
            # phase 0, so they stay "arbitrary" as well.
            dimension_semantics=("arbitrary", "arbitrary", "arbitrary"),
            vmem_limit_bytes=vmem_limit),
    )(x, w, g, beta)

    if lp != L:
        out = out[:, :, :L]
    return out


def _reference_forward(x, conv_w, conv_b, bn_gamma, bn_beta):
    """Pure-JAX reference matching the PyTorch training-mode forward (with conv bias)."""
    y = jnp.einsum("bcl,oc->bol", x.astype(jnp.float32), conv_w[:, :, 0])
    y = y + conv_b[None, :, None]
    mean = jnp.mean(y, axis=(0, 2), keepdims=True)
    var = jnp.mean((y - mean) ** 2, axis=(0, 2), keepdims=True)
    yhat = (y - mean) * jax.lax.rsqrt(var + BN_EPS)
    return jnp.maximum(yhat * bn_gamma[None, :, None] + bn_beta[None, :, None], 0.0)


if __name__ == "__main__":
    key = jax.random.PRNGKey(0)
    k_x, k_w, k_b, k_g, k_be = jax.random.split(key, 5)

    # Deterministic parameters (PyTorch-style uniform bounds for Conv1d).
    bound = 1.0 / (CIN ** 0.5)
    conv_w = jax.random.uniform(k_w, (COUT, CIN, 1), jnp.float32, -bound, bound)
    conv_b = jax.random.uniform(k_b, (COUT,), jnp.float32, -bound, bound)
    bn_gamma = 1.0 + 0.1 * jax.random.normal(k_g, (COUT,), dtype=jnp.float32)
    bn_beta = 0.1 * jax.random.normal(k_be, (COUT,), dtype=jnp.float32)

    # Case 1: lane-aligned L (batch-blocked fast path, conv output cached in VMEM).
    B, L = 2, 384
    x = jax.random.normal(k_x, (B, CIN, L), dtype=jnp.float32)
    out = jax.block_until_ready(
        base_learner_forward(x, conv_w, conv_b, bn_gamma, bn_beta))
    ref = _reference_forward(x, conv_w, conv_b, bn_gamma, bn_beta)
    assert out.shape == (B, COUT, L)
    err1 = float(jnp.max(jnp.abs(out - ref)))
    assert jnp.allclose(out, ref, atol=2e-3, rtol=2e-3), (
        "case1 mismatch vs reference, max abs err = %e" % err1)

    # Case 2: ragged L (exercises the zero-padding path) with an odd batch.
    B2, L2 = 3, 200
    x2 = jax.random.normal(k_x, (B2, CIN, L2), dtype=jnp.float32)
    out2 = jax.block_until_ready(
        base_learner_forward(x2, conv_w, conv_b, bn_gamma, bn_beta))
    ref2 = _reference_forward(x2, conv_w, conv_b, bn_gamma, bn_beta)
    assert out2.shape == (B2, COUT, L2)
    err2 = float(jnp.max(jnp.abs(out2 - ref2)))
    assert jnp.allclose(out2, ref2, atol=2e-3, rtol=2e-3), (
        "case2 mismatch vs reference, max abs err = %e" % err2)

    print("KERNEL_OK")
</pallas_src>

<mosaic_0001>
module attributes {stable_mosaic.version = 11 : i64} {
  func.func @_base_learner_kernel(%arg0: i32, %arg1: i32, %arg2: i32, %arg3: memref<2x128x384xf32, #tpu.memory_space<vmem>>, %arg4: memref<64x128xf32, #tpu.memory_space<vmem>>, %arg5: memref<64x1xf32, #tpu.memory_space<vmem>>, %arg6: memref<64x1xf32, #tpu.memory_space<vmem>>, %arg7: memref<2x64x384xf32, #tpu.memory_space<vmem>>, %arg8: memref<64x128xf32, #tpu.memory_space<vmem>>, %arg9: memref<64x128xf32, #tpu.memory_space<vmem>>, %arg10: memref<64x1xf32, #tpu.memory_space<vmem>>, %arg11: memref<64x1xf32, #tpu.memory_space<vmem>>, %arg12: memref<2x64x384xf32, #tpu.memory_space<vmem>>) attributes {dimension_semantics = [#tpu.dimension_semantics<arbitrary>, #tpu.dimension_semantics<arbitrary>, #tpu.dimension_semantics<arbitrary>], iteration_bounds = array<i64: 2, 1, 1>, scalar_prefetch = 0 : i64, scratch_operands = 5 : i64, tpu.core_type = #tpu.core_type<tc>, window_params = [{transform_indices = @transform_0, window_bounds = array<i64: 2, 128, 384>}, {pipeline_mode = #tpu.pipeline_mode<synchronous>, transform_indices = @transform_1, window_bounds = array<i64: 64, 128>}, {pipeline_mode = #tpu.pipeline_mode<synchronous>, transform_indices = @transform_2, window_bounds = array<i64: 64, 1>}, {pipeline_mode = #tpu.pipeline_mode<synchronous>, transform_indices = @transform_3, window_bounds = array<i64: 64, 1>}, {transform_indices = @transform_4, window_bounds = array<i64: 2, 64, 384>}]} {
    %c0_i32 = arith.constant 0 : i32
    %0 = arith.cmpi eq, %arg1, %c0_i32 : i32
    %c0_i32_0 = arith.constant 0 : i32
    %1 = arith.cmpi eq, %arg2, %c0_i32_0 : i32
    %2 = arith.andi %0, %1 : i1
    %c0 = arith.constant 0 : index
    %c0_1 = arith.constant 0 : index
    %3 = vector.load %arg4[%c0, %c0_1] : memref<64x128xf32, #tpu.memory_space<vmem>>, vector<64x128xf32>
    %c0_i32_2 = arith.constant 0 : i32
    %4 = arith.cmpi eq, %arg0, %c0_i32_2 : i32
    %5 = arith.extui %4 : i1 to i32
    %c0_i32_3 = arith.constant 0 : i32
    %6 = arith.cmpi ne, %5, %c0_i32_3 : i32
    scf.if %6 {
      %10 = arith.extui %2 : i1 to i32
      %c0_i32_5 = arith.constant 0 : i32
      %11 = arith.cmpi ne, %10, %c0_i32_5 : i32
      scf.if %11 {
        %cst_31 = arith.constant 0.000000e+00 : f32
        %66 = vector.broadcast %cst_31 : f32 to vector<64x128xf32>
        %c0_32 = arith.constant 0 : index
        %c0_33 = arith.constant 0 : index
        %67 = vector.load %arg8[%c0_32, %c0_33] : memref<64x128xf32, #tpu.memory_space<vmem>>, vector<64x128xf32>
        tpu.vector_store %arg8[%c0_32, %c0_33], %66 {strides = array<i32>} : memref<64x128xf32, #tpu.memory_space<vmem>>, vector<64x128xf32>,
        %cst_34 = arith.constant 0.000000e+00 : f32
        %68 = vector.broadcast %cst_34 : f32 to vector<64x128xf32>
        %c0_35 = arith.constant 0 : index
        %c0_36 = arith.constant 0 : index
        %69 = vector.load %arg9[%c0_35, %c0_36] : memref<64x128xf32, #tpu.memory_space<vmem>>, vector<64x128xf32>
        tpu.vector_store %arg9[%c0_35, %c0_36], %68 {strides = array<i32>} : memref<64x128xf32, #tpu.memory_space<vmem>>, vector<64x128xf32>,
      } else {
      }
      %cst = arith.constant 0.000000e+00 : f32
      %12 = vector.broadcast %cst : f32 to vector<64x128xf32>
      %cst_6 = arith.constant 0.000000e+00 : f32
      %13 = vector.broadcast %cst_6 : f32 to vector<64x128xf32>
      %c0_7 = arith.constant 0 : index
      %c0_8 = arith.constant 0 : index
      %c0_9 = arith.constant 0 : index
      %14 = vector.load %arg3[%c0_7, %c0_8, %c0_9] : memref<2x128x384xf32, #tpu.memory_space<vmem>>, vector<1x128x384xf32>
      %15 = vector.shape_cast %14 : vector<1x128x384xf32> to vector<128x384xf32>
      %cst_10 = arith.constant dense<0.000000e+00> : vector<64x384xf32>
      %16 = tpu.matmul %3, %15, %cst_10 {dimension_numbers = #tpu.dot_dimension_numbers<[1], [0], [0], [1], [0, 0, 1, 1], [], []>} : vector<64x128xf32>, vector<128x384xf32>, vector<64x384xf32> -> vector<64x384xf32>
      %c2_i32 = arith.constant 2 : i32
      %17 = arith.muli %arg1, %c2_i32 : i32
      %c0_i32_11 = arith.constant 0 : i32
      %18 = arith.addi %17, %c0_i32_11 : i32
      %c1_i32_12 = arith.constant 1 : i32
      %19 = arith.muli %18, %c1_i32_12 : i32
      %20 = arith.addi %19, %arg2 : i32
      %21 = arith.index_cast %20 : i32 to index
      %c0_13 = arith.constant 0 : index
      %c0_14 = arith.constant 0 : index
      %22 = vector.load %arg12[%21, %c0_13, %c0_14] : memref<2x64x384xf32, #tpu.memory_space<vmem>>, vector<1x64x384xf32>
      %23 = vector.shape_cast %22 : vector<1x64x384xf32> to vector<64x384xf32>
      %24 = vector.shape_cast %16 : vector<64x384xf32> to vector<1x64x384xf32>
      tpu.vector_store %arg12[%21, %c0_13, %c0_14], %24 {strides = array<i32>} : memref<2x64x384xf32, #tpu.memory_space<vmem>>, vector<1x64x384xf32>,
      %25 = vector.extract_strided_slice %16 {offsets = [0, 0], sizes = [64, 128], strides = [1, 1]} : vector<64x384xf32> to vector<64x128xf32>
      %26 = arith.addf %12, %25 : vector<64x128xf32>
      %27 = arith.mulf %25, %25 : vector<64x128xf32>
      %28 = arith.addf %13, %27 : vector<64x128xf32>
      %29 = vector.extract_strided_slice %16 {offsets = [0, 128], sizes = [64, 128], strides = [1, 1]} : vector<64x384xf32> to vector<64x128xf32>
      %30 = arith.addf %26, %29 : vector<64x128xf32>
      %31 = arith.mulf %29, %29 : vector<64x128xf32>
      %32 = arith.addf %28, %31 : vector<64x128xf32>
      %33 = vector.extract_strided_slice %16 {offsets = [0, 256], sizes = [64, 128], strides = [1, 1]} : vector<64x384xf32> to vector<64x128xf32>
      %34 = arith.addf %30, %33 : vector<64x128xf32>
      %35 = arith.mulf %33, %33 : vector<64x128xf32>
      %36 = arith.addf %32, %35 : vector<64x128xf32>
      %c1 = arith.constant 1 : index
      %c0_15 = arith.constant 0 : index
      %c0_16 = arith.constant 0 : index
      %37 = vector.load %arg3[%c1, %c0_15, %c0_16] : memref<2x128x384xf32, #tpu.memory_space<vmem>>, vector<1x128x384xf32>
      %38 = vector.shape_cast %37 : vector<1x128x384xf32> to vector<128x384xf32>
      %cst_17 = arith.constant dense<0.000000e+00> : vector<64x384xf32>
      %39 = tpu.matmul %3, %38, %cst_17 {dimension_numbers = #tpu.dot_dimension_numbers<[1], [0], [0], [1], [0, 0, 1, 1], [], []>} : vector<64x128xf32>, vector<128x384xf32>, vector<64x384xf32> -> vector<64x384xf32>
      %c2_i32_18 = arith.constant 2 : i32
      %40 = arith.muli %arg1, %c2_i32_18 : i32
      %c1_i32_19 = arith.constant 1 : i32
      %41 = arith.addi %40, %c1_i32_19 : i32
      %c1_i32_20 = arith.constant 1 : i32
      %42 = arith.muli %41, %c1_i32_20 : i32
      %43 = arith.addi %42, %arg2 : i32
      %44 = arith.index_cast %43 : i32 to index
      %c0_21 = arith.constant 0 : index
      %c0_22 = arith.constant 0 : index
      %45 = vector.load %arg12[%44, %c0_21, %c0_22] : memref<2x64x384xf32, #tpu.memory_space<vmem>>, vector<1x64x384xf32>
      %46 = vector.shape_cast %45 : vector<1x64x384xf32> to vector<64x384xf32>
      %47 = vector.shape_cast %39 : vector<64x384xf32> to vector<1x64x384xf32>
      tpu.vector_store %arg12[%44, %c0_21, %c0_22], %47 {strides = array<i32>} : memref<2x64x384xf32, #tpu.memory_space<vmem>>, vector<1x64x384xf32>,
      %48 = vector.extract_strided_slice %39 {offsets = [0, 0], sizes = [64, 128], strides = [1, 1]} : vector<64x384xf32> to vector<64x128xf32>
      %49 = arith.addf %34, %48 : vector<64x128xf32>
      %50 = arith.mulf %48, %48 : vector<64x128xf32>
      %51 = arith.addf %36, %50 : vector<64x128xf32>
      %52 = vector.extract_strided_slice %39 {offsets = [0, 128], sizes = [64, 128], strides = [1, 1]} : vector<64x384xf32> to vector<64x128xf32>
      %53 = arith.addf %49, %52 : vector<64x128xf32>
      %54 = arith.mulf %52, %52 : vector<64x128xf32>
      %55 = arith.addf %51, %54 : vector<64x128xf32>
      %56 = vector.extract_strided_slice %39 {offsets = [0, 256], sizes = [64, 128], strides = [1, 1]} : vector<64x384xf32> to vector<64x128xf32>
      %57 = arith.addf %53, %56 : vector<64x128xf32>
      %58 = arith.mulf %56, %56 : vector<64x128xf32>
      %59 = arith.addf %55, %58 : vector<64x128xf32>
      %c0_23 = arith.constant 0 : index
      %c0_24 = arith.constant 0 : index
      %60 = vector.load %arg8[%c0_23, %c0_24] : memref<64x128xf32, #tpu.memory_space<vmem>>, vector<64x128xf32>
      %61 = arith.addf %60, %57 : vector<64x128xf32>
      %c0_25 = arith.constant 0 : index
      %c0_26 = arith.constant 0 : index
      %62 = vector.load %arg8[%c0_25, %c0_26] : memref<64x128xf32, #tpu.memory_space<vmem>>, vector<64x128xf32>
      tpu.vector_store %arg8[%c0_25, %c0_26], %61 {strides = array<i32>} : memref<64x128xf32, #tpu.memory_space<vmem>>, vector<64x128xf32>,
      %c0_27 = arith.constant 0 : index
      %c0_28 = arith.constant 0 : index
      %63 = vector.load %arg9[%c0_27, %c0_28] : memref<64x128xf32, #tpu.memory_space<vmem>>, vector<64x128xf32>
      %64 = arith.addf %63, %59 : vector<64x128xf32>
      %c0_29 = arith.constant 0 : index
      %c0_30 = arith.constant 0 : index
      %65 = vector.load %arg9[%c0_29, %c0_30] : memref<64x128xf32, #tpu.memory_space<vmem>>, vector<64x128xf32>
      tpu.vector_store %arg9[%c0_29, %c0_30], %64 {strides = array<i32>} : memref<64x128xf32, #tpu.memory_space<vmem>>, vector<64x128xf32>,
    } else {
    }
    %c1_i32 = arith.constant 1 : i32
    %7 = arith.cmpi eq, %arg0, %c1_i32 : i32
    %8 = arith.extui %7 : i1 to i32
    %c0_i32_4 = arith.constant 0 : i32
    %9 = arith.cmpi ne, %8, %c0_i32_4 : i32
    scf.if %9 {
      %10 = arith.extui %2 : i1 to i32
      %c0_i32_5 = arith.constant 0 : i32
      %11 = arith.cmpi ne, %10, %c0_i32_5 : i32
      scf.if %11 {
        %c0_25 = arith.constant 0 : index
        %c0_26 = arith.constant 0 : index
        %46 = vector.load %arg8[%c0_25, %c0_26] : memref<64x128xf32, #tpu.memory_space<vmem>>, vector<64x128xf32>
        %cst_27 = arith.constant dense<0.000000e+00> : vector<64xf32>
        %47 = vector.multi_reduction <add>, %46, %cst_27 [1] : vector<64x128xf32> to vector<64xf32>
        %48 = vector.shape_cast %47 : vector<64xf32> to vector<64x1xf32>
        %c0_28 = arith.constant 0 : index
        %c0_29 = arith.constant 0 : index
        %49 = vector.load %arg9[%c0_28, %c0_29] : memref<64x128xf32, #tpu.memory_space<vmem>>, vector<64x128xf32>
        %cst_30 = arith.constant dense<0.000000e+00> : vector<64xf32>
        %50 = vector.multi_reduction <add>, %49, %cst_30 [1] : vector<64x128xf32> to vector<64xf32>
        %51 = vector.shape_cast %50 : vector<64xf32> to vector<64x1xf32>
        %cst_31 = arith.constant 0.00130208337 : f32
        %52 = vector.broadcast %cst_31 : f32 to vector<64x1xf32>
        %53 = arith.mulf %48, %52 : vector<64x1xf32>
        %cst_32 = arith.constant 0.00130208337 : f32
        %54 = vector.broadcast %cst_32 : f32 to vector<64x1xf32>
        %55 = arith.mulf %51, %54 : vector<64x1xf32>
        %56 = arith.mulf %53, %53 : vector<64x1xf32>
        %57 = arith.subf %55, %56 : vector<64x1xf32>
        %cst_33 = arith.constant 0.000000e+00 : f32
        %58 = vector.broadcast %cst_33 : f32 to vector<64x1xf32>
        %59 = arith.maximumf %57, %58 : vector<64x1xf32>
        %c0_34 = arith.constant 0 : index
        %c0_35 = arith.constant 0 : index
        %60 = vector.load %arg5[%c0_34, %c0_35] : memref<64x1xf32, #tpu.memory_space<vmem>>, vector<64x1xf32>
        %cst_36 = arith.constant 9.99999974E-6 : f32
        %61 = vector.broadcast %cst_36 : f32 to vector<64x1xf32>
        %62 = arith.addf %59, %61 : vector<64x1xf32>
        %63 = math.rsqrt %62 : vector<64x1xf32>
        %64 = arith.mulf %60, %63 : vector<64x1xf32>
        %c0_37 = arith.constant 0 : index
        %c0_38 = arith.constant 0 : index
        %65 = vector.load %arg10[%c0_37, %c0_38] : memref<64x1xf32, #tpu.memory_space<vmem>>, vector<64x1xf32>
        tpu.vector_store %arg10[%c0_37, %c0_38], %64 {strides = array<i32>} : memref<64x1xf32, #tpu.memory_space<vmem>>, vector<64x1xf32>,
        %c0_39 = arith.constant 0 : index
        %c0_40 = arith.constant 0 : index
        %66 = vector.load %arg6[%c0_39, %c0_40] : memref<64x1xf32, #tpu.memory_space<vmem>>, vector<64x1xf32>
        %67 = arith.mulf %53, %64 : vector<64x1xf32>
        %68 = arith.subf %66, %67 : vector<64x1xf32>
        %c0_41 = arith.constant 0 : index
        %c0_42 = arith.constant 0 : index
        %69 = vector.load %arg11[%c0_41, %c0_42] : memref<64x1xf32, #tpu.memory_space<vmem>>, vector<64x1xf32>
        tpu.vector_store %arg11[%c0_41, %c0_42], %68 {strides = array<i32>} : memref<64x1xf32, #tpu.memory_space<vmem>>, vector<64x1xf32>,
      } else {
      }
      %c0_6 = arith.constant 0 : index
      %c0_7 = arith.constant 0 : index
      %12 = vector.load %arg10[%c0_6, %c0_7] : memref<64x1xf32, #tpu.memory_space<vmem>>, vector<64x1xf32>
      %c0_8 = arith.constant 0 : index
      %c0_9 = arith.constant 0 : index
      %13 = vector.load %arg11[%c0_8, %c0_9] : memref<64x1xf32, #tpu.memory_space<vmem>>, vector<64x1xf32>
      %c2_i32 = arith.constant 2 : i32
      %14 = arith.muli %arg1, %c2_i32 : i32
      %c0_i32_10 = arith.constant 0 : i32
      %15 = arith.addi %14, %c0_i32_10 : i32
      %c1_i32_11 = arith.constant 1 : i32
      %16 = arith.muli %15, %c1_i32_11 : i32
      %17 = arith.addi %16, %arg2 : i32
      %18 = arith.index_cast %17 : i32 to index
      %c0_12 = arith.constant 0 : index
      %c0_13 = arith.constant 0 : index
      %19 = vector.load %arg12[%18, %c0_12, %c0_13] : memref<2x64x384xf32, #tpu.memory_space<vmem>>, vector<1x64x384xf32>
      %20 = vector.shape_cast %19 : vector<1x64x384xf32> to vector<64x384xf32>
      %21 = vector.broadcast %12 : vector<64x1xf32> to vector<64x384xf32>
      %22 = arith.mulf %20, %21 : vector<64x384xf32>
      %23 = vector.broadcast %13 : vector<64x1xf32> to vector<64x384xf32>
      %24 = arith.addf %22, %23 : vector<64x384xf32>
      %cst = arith.constant 0.000000e+00 : f32
      %25 = vector.broadcast %cst : f32 to vector<64x384xf32>
      %26 = arith.maximumf %24, %25 : vector<64x384xf32>
      %c0_14 = arith.constant 0 : index
      %c0_15 = arith.constant 0 : index
      %c0_16 = arith.constant 0 : index
      %27 = vector.load %arg7[%c0_14, %c0_15, %c0_16] : memref<2x64x384xf32, #tpu.memory_space<vmem>>, vector<1x64x384xf32>
      %28 = vector.shape_cast %27 : vector<1x64x384xf32> to vector<64x384xf32>
      %29 = vector.shape_cast %26 : vector<64x384xf32> to vector<1x64x384xf32>
      tpu.vector_store %arg7[%c0_14, %c0_15, %c0_16], %29 {strides = array<i32>} : memref<2x64x384xf32, #tpu.memory_space<vmem>>, vector<1x64x384xf32>,
      %c2_i32_17 = arith.constant 2 : i32
      %30 = arith.muli %arg1, %c2_i32_17 : i32
      %c1_i32_18 = arith.constant 1 : i32
      %31 = arith.addi %30, %c1_i32_18 : i32
      %c1_i32_19 = arith.constant 1 : i32
      %32 = arith.muli %31, %c1_i32_19 : i32
      %33 = arith.addi %32, %arg2 : i32
      %34 = arith.index_cast %33 : i32 to index
      %c0_20 = arith.constant 0 : index
      %c0_21 = arith.constant 0 : index
      %35 = vector.load %arg12[%34, %c0_20, %c0_21] : memref<2x64x384xf32, #tpu.memory_space<vmem>>, vector<1x64x384xf32>
      %36 = vector.shape_cast %35 : vector<1x64x384xf32> to vector<64x384xf32>
      %37 = vector.broadcast %12 : vector<64x1xf32> to vector<64x384xf32>
      %38 = arith.mulf %36, %37 : vector<64x384xf32>
      %39 = vector.broadcast %13 : vector<64x1xf32> to vector<64x384xf32>
      %40 = arith.addf %38, %39 : vector<64x384xf32>
      %cst_22 = arith.constant 0.000000e+00 : f32
      %41 = vector.broadcast %cst_22 : f32 to vector<64x384xf32>
      %42 = arith.maximumf %40, %41 : vector<64x384xf32>
      %c1 = arith.constant 1 : index
      %c0_23 = arith.constant 0 : index
      %c0_24 = arith.constant 0 : index
      %43 = vector.load %arg7[%c1, %c0_23, %c0_24] : memref<2x64x384xf32, #tpu.memory_space<vmem>>, vector<1x64x384xf32>
      %44 = vector.shape_cast %43 : vector<1x64x384xf32> to vector<64x384xf32>
      %45 = vector.shape_cast %42 : vector<64x384xf32> to vector<1x64x384xf32>
      tpu.vector_store %arg7[%c1, %c0_23, %c0_24], %45 {strides = array<i32>} : memref<2x64x384xf32, #tpu.memory_space<vmem>>, vector<1x64x384xf32>,
    } else {
    }
    return
  }
  func.func @transform_0(%arg0: i32, %arg1: i32, %arg2: i32) -> (i32, i32, i32) {
    %c1_i32 = arith.constant 1 : i32
    %0 = arith.subi %c1_i32, %arg0 : i32
    %1 = arith.muli %arg1, %0 : i32
    %c1_i32_0 = arith.constant 1 : i32
    %2 = arith.subi %c1_i32_0, %arg0 : i32
    %3 = arith.muli %arg2, %2 : i32
    %c0_i32 = arith.constant 0 : i32
    %c0_i32_1 = arith.constant 0 : i32
    return %1, %c0_i32, %3 : i32, i32, i32
  }
  func.func @transform_1(%arg0: i32, %arg1: i32, %arg2: i32) -> (i32, i32) {
    %c0_i32 = arith.constant 0 : i32
    %c0_i32_0 = arith.constant 0 : i32
    %c0_i32_1 = arith.constant 0 : i32
    return %c0_i32, %c0_i32_0 : i32, i32
  }
  func.func @transform_2(%arg0: i32, %arg1: i32, %arg2: i32) -> (i32, i32) {
    %c0_i32 = arith.constant 0 : i32
    %c0_i32_0 = arith.constant 0 : i32
    %c0_i32_1 = arith.constant 0 : i32
    return %c0_i32, %c0_i32_0 : i32, i32
  }
  func.func @transform_3(%arg0: i32, %arg1: i32, %arg2: i32) -> (i32, i32) {
    %c0_i32 = arith.constant 0 : i32
    %c0_i32_0 = arith.constant 0 : i32
    %c0_i32_1 = arith.constant 0 : i32
    return %c0_i32, %c0_i32_0 : i32, i32
  }
  func.func @transform_4(%arg0: i32, %arg1: i32, %arg2: i32) -> (i32, i32, i32) {
    %0 = arith.muli %arg1, %arg0 : i32
    %1 = arith.muli %arg2, %arg0 : i32
    %c0_i32 = arith.constant 0 : i32
    %c0_i32_0 = arith.constant 0 : i32
    return %0, %c0_i32, %1 : i32, i32, i32
  }
}

</mosaic_0001>

<llo_original>
// kernel: tpu_custom_call.1
$region0: #{tpu_custom_call.1}
  #allocation0 [shape = 'u32[]', space=smem, size = 0x4, offset = 0x4, fixed_abs, tag = 'smem constant byte address 0x4 - core index']
  #allocation1 [shape = 'u32[144,128]{1,0:T(1,128)}', space=vmem, size = 0x12000, scoped, tag = 'internal scratch']
  #allocation2 [shape = 'f32[64,128]{1,0:T(8,128)}', space=vmem, size = 0x8000, scoped, tag = 'scratch operand']
  #allocation3 [shape = 'f32[64,128]{1,0:T(8,128)}', space=vmem, size = 0x8000, scoped, tag = 'scratch operand']
  #allocation4 [shape = 'f32[64,1]{1,0:T(8,128)}', space=vmem, size = 0x8000, scoped, tag = 'scratch operand']
  #allocation5 [shape = 'f32[64,1]{1,0:T(8,128)}', space=vmem, size = 0x8000, scoped, tag = 'scratch operand']
  #allocation6 [shape = 'f32[2,64,384]{2,1,0:T(8,128)}', space=vmem, size = 0x30000, scoped, tag = 'scratch operand']
  %s0 = inlined_call_operand.hbm [shape: f32[2,128,384], index: 0, kind: input, shape index: {}]
  %s1 = inlined_call_operand.vmem [shape: f32[64,128], index: 1, kind: input, shape index: {}]
  %s2 = inlined_call_operand.vmem [shape: f32[64,1], index: 2, kind: input, shape index: {}]
  %s3 = inlined_call_operand.vmem [shape: f32[64,1], index: 3, kind: input, shape index: {}]
  %s4 = inlined_call_operand.hbm [shape: f32[2,64,384], index: 4, kind: output, shape index: {}]
  %s5 = sld [smem:[#allocation0]]
  $region69: #{tpu_custom_call.1} parent=0
    _
  %s7 = ssub.s32 1, %s5
  %s8 = scalar_select 0, %s7, %s5
  $region1: #{tpu_custom_call.1} parent=0
    #allocation7 [shape = 'u8[786432]{0}', space=vmem, size = 0xc0000, scoped, tag = 'input window, operand 0']
    #allocation8 [shape = 's32[2]{0}', space=sflag, size = 0x8, scoped, tag = 'scoped memory for tpu_custom_call.1']
    #allocation9 [shape = 's32[2]{0}', space=sflag, size = 0x8, scoped, tag = 'scoped memory for tpu_custom_call.1']
    #allocation10 [shape = 'u8[393216]{0}', space=vmem, size = 0x60000, scoped, tag = 'output window, operand 0']
    %9 = vsyncpa [#allocation8], 0
    %s10 = scalar_lea.sflag [#allocation8], 1
    %11 = vsyncpa %s10, 0
    %12 = vsyncpa [#allocation9], 0
    %s13 = scalar_lea.sflag [#allocation9], 1
    %14 = vsyncpa %s13, 0
    loop: start=0, step=1, limit=4
    $region2: #{tpu_custom_call.1} parent=1 // loop_pre_header
      _
    $region3: #{tpu_custom_call.1} parent=1 // loop_header
      %s16 = sphi 0, %s20
      %p17 = scmp.ge.s32.totalorder %s16, 4
      %s23 = sphi 0, %s42
      %s24 = sphi 0, %s38
      %s25 = sphi 0, %s34
      %s26 = sphi 0, %s23
      %s27 = sphi 0, %s24
      %s28 = sphi 0, %s25
      %s29 = sphi 0, %s26
      %s30 = sphi 0, %s27
      %s31 = sphi 0, %s28
      %s53 = sphi 0, %s55
      %s56 = sphi 0, %s53
      %s57 = sphi 0, %s56
      %s73 = sphi 0, %s57
      %s77 = sphi 0, %s77
      %s79 = sphi 0, %s77
      %s80 = sphi 0, %s79
      %s94 = sphi 0, %s80
      %s98 = sphi 0, %s98
      %s100 = sphi 0, %s98
      %s101 = sphi 0, %s100
      %s115 = sphi 0, %s101
      %s119 = sphi 0, %s119
      %s121 = sphi 0, %s119
      %s122 = sphi 0, %s121
      %s136 = sphi 0, %s122
      %s148 = sphi 0, %s150
      %s151 = sphi 0, %s148
      %s152 = sphi 0, %s151
      %s168 = sphi 0, %s152
    $region4: #{tpu_custom_call.1} parent=1 // loop_header_branch
      %19 = sbr.rel (%p17) target = $region8
    $region5: #{tpu_custom_call.1} parent=1 // loop_body
      %s21 = ssub.s32 %s16, 1
      %s22 = ssub.s32 %s16, 2
      %s32 = sadd.s32 1, %s25
      %p33 = scmp.ge.s32.totalorder %s32, 1
      %s34 = scalar_select %p33, 0, %s32
      %s35 = sadd.s32 1, %s24
      %s36 = scalar_select %p33, %s35, %s24
      %p37 = scmp.ge.s32.totalorder %s36, 1
      %s38 = scalar_select %p37, 0, %s36
      %s39 = sadd.s32 1, %s23
      %s40 = scalar_select %p37, %s39, %s23
      %p41 = scmp.ge.s32.totalorder %s40, 2
      %s42 = scalar_select %p41, 0, %s40
      %s43 = ssub.s32 1, %s23
      %s44 = smul.u32 %s24, %s43
      %s45 = smul.u32 %s25, %s43
      %s46 = ssub.s32 1, %s42
      %s47 = smul.u32 %s38, %s46
      %s48 = smul.u32 %s34, %s46
      %s49 = ssub.s32 %s44, %s47
      %s50 = ssub.s32 %s45, %s48
      %s51 = sor.u32 %s49, %s50
      %p52 = scmp.eq.s32.totalorder %s51, 0
      %s54 = sadd.s32 %s53, 1
      %s55 = scalar_select %p52, %s53, %s54
      %p58 = pneg %p52
      %p59 = scmp.eq.s32.totalorder %s16, 1
      %p60 = por %p58, %p59
      %p61 = scmp.ne.s32.totalorder %s53, %s56
      %p62 = scmp.eq.s32.totalorder %s16, 0
      %p63 = por %p61, %p62
      %p64 = scmp.ne.s32.totalorder %s53, %s56
      %p65 = scmp.eq.s32.totalorder %s21, 1
      %p66 = por %p64, %p65
      %p67 = scmp.ne.s32.totalorder %s56, %s57
      %p68 = scmp.eq.s32.totalorder %s21, 0
      %p69 = por %p67, %p68
      %p70 = scmp.ne.s32.totalorder %s56, %s57
      %p71 = scmp.eq.s32.totalorder %s22, 1
      %p72 = por %p70, %p71
      %p74 = scmp.ne.s32.totalorder %s57, %s73
      %p75 = scmp.eq.s32.totalorder %s22, 0
      %p76 = por %p74, %p75
      %s78 = sadd.s32 %s77, 1
      %p81 = scmp.eq.s32.totalorder %s16, 1
      %p82 = scmp.ne.s32.totalorder %s77, %s79
      %p83 = scmp.eq.s32.totalorder %s16, 0
      %p84 = por %p82, %p83
      %p85 = scmp.ne.s32.totalorder %s77, %s79
      %p86 = scmp.eq.s32.totalorder %s21, 1
      %p87 = por %p85, %p86
      %p88 = scmp.ne.s32.totalorder %s79, %s80
      %p89 = scmp.eq.s32.totalorder %s21, 0
      %p90 = por %p88, %p89
      %p91 = scmp.ne.s32.totalorder %s79, %s80
      %p92 = scmp.eq.s32.totalorder %s22, 1
      %p93 = por %p91, %p92
      %p95 = scmp.ne.s32.totalorder %s80, %s94
      %p96 = scmp.eq.s32.totalorder %s22, 0
      %p97 = por %p95, %p96
      %s99 = sadd.s32 %s98, 1
      %p102 = scmp.eq.s32.totalorder %s16, 1
      %p103 = scmp.ne.s32.totalorder %s98, %s100
      %p104 = scmp.eq.s32.totalorder %s16, 0
      %p105 = por %p103, %p104
      %p106 = scmp.ne.s32.totalorder %s98, %s100
      %p107 = scmp.eq.s32.totalorder %s21, 1
      %p108 = por %p106, %p107
      %p109 = scmp.ne.s32.totalorder %s100, %s101
      %p110 = scmp.eq.s32.totalorder %s21, 0
      %p111 = por %p109, %p110
      %p112 = scmp.ne.s32.totalorder %s100, %s101
      %p113 = scmp.eq.s32.totalorder %s22, 1
      %p114 = por %p112, %p113
      %p116 = scmp.ne.s32.totalorder %s101, %s115
      %p117 = scmp.eq.s32.totalorder %s22, 0
      %p118 = por %p116, %p117
      %s120 = sadd.s32 %s119, 1
      %p123 = scmp.eq.s32.totalorder %s16, 1
      %p124 = scmp.ne.s32.totalorder %s119, %s121
      %p125 = scmp.eq.s32.totalorder %s16, 0
      %p126 = por %p124, %p125
      %p127 = scmp.ne.s32.totalorder %s119, %s121
      %p128 = scmp.eq.s32.totalorder %s21, 1
      %p129 = por %p127, %p128
      %p130 = scmp.ne.s32.totalorder %s121, %s122
      %p131 = scmp.eq.s32.totalorder %s21, 0
      %p132 = por %p130, %p131
      %p133 = scmp.ne.s32.totalorder %s121, %s122
      %p134 = scmp.eq.s32.totalorder %s22, 1
      %p135 = por %p133, %p134
      %p137 = scmp.ne.s32.totalorder %s122, %s136
      %p138 = scmp.eq.s32.totalorder %s22, 0
      %p139 = por %p137, %p138
      %s140 = smul.u32 %s24, %s23
      %s141 = smul.u32 %s25, %s23
      %s142 = smul.u32 %s38, %s42
      %s143 = smul.u32 %s34, %s42
      %s144 = ssub.s32 %s140, %s142
      %s145 = ssub.s32 %s141, %s143
      %s146 = sor.u32 %s144, %s145
      %p147 = scmp.eq.s32.totalorder %s146, 0
      %s149 = sadd.s32 %s148, 1
      %s150 = scalar_select %p147, %s148, %s149
      %p153 = pneg %p147
      %p154 = scmp.eq.s32.totalorder %s16, 1
      %p155 = por %p153, %p154
      %p156 = scmp.ne.s32.totalorder %s148, %s151
      %p157 = scmp.eq.s32.totalorder %s16, 0
      %p158 = por %p156, %p157
      %p159 = scmp.ne.s32.totalorder %s148, %s151
      %p160 = scmp.eq.s32.totalorder %s21, 1
      %p161 = por %p159, %p160
      %p162 = scmp.ne.s32.totalorder %s151, %s152
      %p163 = scmp.eq.s32.totalorder %s21, 0
      %p164 = por %p162, %p163
      %p165 = scmp.ne.s32.totalorder %s151, %s152
      %p166 = scmp.eq.s32.totalorder %s22, 1
      %p167 = por %p165, %p166
      %p169 = scmp.ne.s32.totalorder %s152, %s168
      %p170 = scmp.eq.s32.totalorder %s22, 0
      %p171 = por %p169, %p170
      %p172 = scmp.le.s32.totalorder 1, %s16
      %p173 = scmp.lt.s32.totalorder %s16, 3
      %p174 = pnand %p172, %p173
      %p175 = pneg %p174
      // Predicated region
      $region9: #{tpu_custom_call.1} parent=5 // pred_check
        _
      $region10: #{tpu_custom_call.1} parent=5 // pred_check_branch
        %177 = sbr.rel (%p174) target = $region12
      $region11: #{tpu_custom_call.1} parent=5 // pred_region
        %s178 = ssub.s32 %s16, 1
        // Predicated region
        $region13: #{tpu_custom_call.1} parent=11 // pred_check
          %p179 = pneg %p90
        $region14: #{tpu_custom_call.1} parent=11 // pred_check_branch
          %181 = sbr.rel (%p179) target = $region16
        $region15: #{tpu_custom_call.1} parent=11 // pred_region
          _
        $region16: #{tpu_custom_call.1} parent=11 // pred_fallthru
          _
        // Predicated region
        $region17: #{tpu_custom_call.1} parent=11 // pred_check
          %p182 = pneg %p111
        $region18: #{tpu_custom_call.1} parent=11 // pred_check_branch
          %184 = sbr.rel (%p182) target = $region20
        $region19: #{tpu_custom_call.1} parent=11 // pred_region
          _
        $region20: #{tpu_custom_call.1} parent=11 // pred_fallthru
          _
        // Predicated region
        $region21: #{tpu_custom_call.1} parent=11 // pred_check
          %p185 = pneg %p132
        $region22: #{tpu_custom_call.1} parent=11 // pred_check_branch
          %187 = sbr.rel (%p185) target = $region24
        $region23: #{tpu_custom_call.1} parent=11 // pred_region
          _
        $region24: #{tpu_custom_call.1} parent=11 // pred_fallthru
          _
      $region12: #{tpu_custom_call.1} parent=5 // pred_fallthru
        _
      %p188 = scmp.lt.s32.totalorder %s16, 2
      // Predicated region
      $region25: #{tpu_custom_call.1} parent=5 // pred_check
        %p189 = pneg %p188
      $region26: #{tpu_custom_call.1} parent=5 // pred_check_branch
        %191 = sbr.rel (%p189) target = $region28
      $region27: #{tpu_custom_call.1} parent=5 // pred_region
        // Predicated region
        $region29: #{tpu_custom_call.1} parent=27 // pred_check
          %p192 = pneg %p63
        $region30: #{tpu_custom_call.1} parent=27 // pred_check_branch
          %194 = sbr.rel (%p192) target = $region32
        $region31: #{tpu_custom_call.1} parent=27 // pred_region
          %s195 = sand.u32 %s53, 1
          %s196 = scalar_lea.sflag [#allocation8], %s195
          %s197 = sand.u32 %s53, 1
          %s198 = smul.addr %s197, 768
          %s199 = scalar_lea.vmem [#allocation7], %s198
          %s200 = ssub.s32 1, %s23
          %s201 = smul.u32 %s24, %s200
          %s202 = smul.u32 %s25, %s200
          %s203 = smul.u32 2, %s201
          %s204 = smul.u32 3, %s202
          %s206 = ssub.s32 12288, 12288
          %207 = vsyncadd %s196, %s206
          %s208 = smul.addr %s203, 48
          %s209 = sadd.s32 %s204, %s208
          %s210 = smul.addr %s209, 128
          %s211 = scalar_lea.hbm %s0, %s210
          %s212 = sshll.u32 %s199, 4
          %s213 = int_to_ptr.vmem [resolvable:$true] %s212
          %218 = dma.hbm_to_vmem [thread:$0]  %s211, 12288, %s213, %s196, 384, 384, 24
        $region32: #{tpu_custom_call.1} parent=27 // pred_fallthru
          _
      $region28: #{tpu_custom_call.1} parent=5 // pred_fallthru
        _
      %p219 = scmp.le.s32.totalorder 1, %s16
      %p220 = scmp.lt.s32.totalorder %s16, 3
      %p221 = pnand %p219, %p220
      %p222 = pneg %p221
      // Predicated region
      $region33: #{tpu_custom_call.1} parent=5 // pred_check
        _
      $region34: #{tpu_custom_call.1} parent=5 // pred_check_branch
        %224 = sbr.rel (%p221) target = $region36
      $region35: #{tpu_custom_call.1} parent=5 // pred_region
        %s225 = ssub.s32 %s16, 1
        %s226 = sand.u32 %s56, 1
        %s227 = scalar_lea.sflag [#allocation8], %s226
        %s228 = sand.u32 %s56, 1
        %s229 = smul.addr %s228, 768
        %s230 = scalar_lea.vmem [#allocation7], %s229
        // Predicated region
        $region37: #{tpu_custom_call.1} parent=35 // pred_check
          %p231 = pneg %p69
        $region38: #{tpu_custom_call.1} parent=35 // pred_check_branch
          %233 = sbr.rel (%p231) target = $region40
        $region39: #{tpu_custom_call.1} parent=35 // pred_region
          %234 = dma.done %s227, 12288
        $region40: #{tpu_custom_call.1} parent=35 // pred_fallthru
          _
        %s235 = sand.u32 %s56, 1
        %s236 = scalar_lea.sflag [#allocation8], %s235
        %s237 = sand.u32 %s56, 1
        %s238 = smul.addr %s237, 768
        %s239 = scalar_lea.vmem [#allocation7], %s238
        %p240 = pneg %p69
        %p241 = pneg %p66
        %p242 = pneg %p90
        %p243 = pneg %p87
        %p244 = pneg %p111
        %p245 = pneg %p108
        %p246 = pneg %p132
        %p247 = pneg %p129
        %p248 = pneg %p164
        %p249 = pneg %p161
        %s250 = sand.u32 %s151, 1
        %s251 = scalar_lea.sflag [#allocation9], %s250
        %s252 = sand.u32 %s151, 1
        %s253 = smul.addr %s252, 384
        %s254 = scalar_lea.vmem [#allocation10], %s253
        %s255 = ssub.s32 1, %s26
        %s256 = smul.u32 %s27, %s255
        %s257 = smul.u32 %s28, %s255
        %s258 = smul.u32 2, %s256
        %s259 = smul.u32 3, %s257
        %s260 = smul.u32 %s27, %s26
        %s261 = smul.u32 %s28, %s26
        %s262 = smul.u32 2, %s260
        %s263 = smul.u32 3, %s261
        %p264 = scmp.eq.s32.totalorder %s27, 0
        %p265 = scmp.eq.s32.totalorder %s28, 0
        %p266 = pnand %p264, %p265
        %p267 = pneg %p266
        %v268 = vld [vmem:[%s1] sm:$0xff]
        %v269 = vld [vmem:[%s1 + $0x8] sm:$0xff]
        %v270 = vld [vmem:[%s1 + $0x10] sm:$0xff]
        %v271 = vld [vmem:[%s1 + $0x18] sm:$0xff]
        %v272 = vld [vmem:[%s1 + $0x20] sm:$0xff]
        %v273 = vld [vmem:[%s1 + $0x28] sm:$0xff]
        %v274 = vld [vmem:[%s1 + $0x30] sm:$0xff]
        %v275 = vld [vmem:[%s1 + $0x38] sm:$0xff]
        %p276 = scmp.eq.s32.totalorder %s26, 0
        // Predicated region
        $region41: #{tpu_custom_call.1} parent=35 // pred_check
          %p277 = pneg %p276
        $region42: #{tpu_custom_call.1} parent=35 // pred_check_branch
          %279 = sbr.rel (%p277) target = $region44
        $region43: #{tpu_custom_call.1} parent=35 // pred_region
          // Predicated region
          $region45: #{tpu_custom_call.1} parent=43 // pred_check
            _
          $region46: #{tpu_custom_call.1} parent=43 // pred_check_branch
            %281 = sbr.rel (%p266) target = $region48
          $region47: #{tpu_custom_call.1} parent=43 // pred_region
            %282 = vst [vmem:[#allocation2] sm:$0xff] 0.0
            %283 = vst [vmem:[#allocation2 + $0x8] sm:$0xff] 0.0
            %284 = vst [vmem:[#allocation2 + $0x10] sm:$0xff] 0.0
            %285 = vst [vmem:[#allocation2 + $0x18] sm:$0xff] 0.0
            %286 = vst [vmem:[#allocation2 + $0x20] sm:$0xff] 0.0
            %287 = vst [vmem:[#allocation2 + $0x28] sm:$0xff] 0.0
            %288 = vst [vmem:[#allocation2 + $0x30] sm:$0xff] 0.0
            %289 = vst [vmem:[#allocation2 + $0x38] sm:$0xff] 0.0
            %290 = vst [vmem:[#allocation3] sm:$0xff] 0.0
            %291 = vst [vmem:[#allocation3 + $0x8] sm:$0xff] 0.0
            %292 = vst [vmem:[#allocation3 + $0x10] sm:$0xff] 0.0
            %293 = vst [vmem:[#allocation3 + $0x18] sm:$0xff] 0.0
            %294 = vst [vmem:[#allocation3 + $0x20] sm:$0xff] 0.0
            %295 = vst [vmem:[#allocation3 + $0x28] sm:$0xff] 0.0
            %296 = vst [vmem:[#allocation3 + $0x30] sm:$0xff] 0.0
            %297 = vst [vmem:[#allocation3 + $0x38] sm:$0xff] 0.0
          $region48: #{tpu_custom_call.1} parent=43 // pred_fallthru
            _
          %v298 = vld [vmem:[%s230] sm:$0xff]
          %v299 = vld [vmem:[%s230 + $0x8] sm:$0xff]
          %v300 = vld [vmem:[%s230 + $0x10] sm:$0xff]
          %v301 = vld [vmem:[%s230 + $0x18] sm:$0xff]
          %v302 = vld [vmem:[%s230 + $0x20] sm:$0xff]
          %v303 = vld [vmem:[%s230 + $0x28] sm:$0xff]
          %v304 = vld [vmem:[%s230 + $0x30] sm:$0xff]
          %v305 = vld [vmem:[%s230 + $0x38] sm:$0xff]
          %v306 = vld [vmem:[%s230 + $0x40] sm:$0xff]
          %v307 = vld [vmem:[%s230 + $0x48] sm:$0xff]
          %v308 = vld [vmem:[%s230 + $0x50] sm:$0xff]
          %v309 = vld [vmem:[%s230 + $0x58] sm:$0xff]
          %v310 = vld [vmem:[%s230 + $0x60] sm:$0xff]
          %v311 = vld [vmem:[%s230 + $0x68] sm:$0xff]
          %v312 = vld [vmem:[%s230 + $0x70] sm:$0xff]
          %v313 = vld [vmem:[%s230 + $0x78] sm:$0xff]
          %v314 = vld [vmem:[%s230 + $0x80] sm:$0xff]
          %v315 = vld [vmem:[%s230 + $0x88] sm:$0xff]
          %v316 = vld [vmem:[%s230 + $0x90] sm:$0xff]
          %v317 = vld [vmem:[%s230 + $0x98] sm:$0xff]
          %v318 = vld [vmem:[%s230 + $0xa0] sm:$0xff]
          %v319 = vld [vmem:[%s230 + $0xa8] sm:$0xff]
          %v320 = vld [vmem:[%s230 + $0xb0] sm:$0xff]
          %v321 = vld [vmem:[%s230 + $0xb8] sm:$0xff]
          %v322 = vld [vmem:[%s230 + $0xc0] sm:$0xff]
          %v323 = vld [vmem:[%s230 + $0xc8] sm:$0xff]
          %v324 = vld [vmem:[%s230 + $0xd0] sm:$0xff]
          %v325 = vld [vmem:[%s230 + $0xd8] sm:$0xff]
          %v326 = vld [vmem:[%s230 + $0xe0] sm:$0xff]
          %v327 = vld [vmem:[%s230 + $0xe8] sm:$0xff]
          %v328 = vld [vmem:[%s230 + $0xf0] sm:$0xff]
          %v329 = vld [vmem:[%s230 + $0xf8] sm:$0xff]
          %v330 = vld [vmem:[%s230 + $0x100] sm:$0xff]
          %v331 = vld [vmem:[%s230 + $0x108] sm:$0xff]
          %v332 = vld [vmem:[%s230 + $0x110] sm:$0xff]
          %v333 = vld [vmem:[%s230 + $0x118] sm:$0xff]
          %v334 = vld [vmem:[%s230 + $0x120] sm:$0xff]
          %v335 = vld [vmem:[%s230 + $0x128] sm:$0xff]
          %v336 = vld [vmem:[%s230 + $0x130] sm:$0xff]
          %v337 = vld [vmem:[%s230 + $0x138] sm:$0xff]
          %v338 = vld [vmem:[%s230 + $0x140] sm:$0xff]
          %v339 = vld [vmem:[%s230 + $0x148] sm:$0xff]
          %v340 = vld [vmem:[%s230 + $0x150] sm:$0xff]
          %v341 = vld [vmem:[%s230 + $0x158] sm:$0xff]
          %v342 = vld [vmem:[%s230 + $0x160] sm:$0xff]
          %v343 = vld [vmem:[%s230 + $0x168] sm:$0xff]
          %v344 = vld [vmem:[%s230 + $0x170] sm:$0xff]
          %v345 = vld [vmem:[%s230 + $0x178] sm:$0xff]
          %346 = vmatprep.subr.mxu0 %v344
          %347 = vmatpush1.msra.mxu0 %v343
          %348 = vmatprep.subr.mxu0 %v341
          %349 = vmatpush1.msra.mxu0 %v340
          %350 = vmatprep.subr.mxu0 %v338
          %351 = vmatpush1.msra.mxu0 %v337
          %352 = vmatprep.subr.mxu0 %v335
          %353 = vmatpush1.msra.mxu0 %v334
          %354 = vmatprep.subr.mxu0 %v332
          %355 = vmatpush1.msra.mxu0 %v331
          %356 = vmatprep.subr.mxu0 %v329
          %357 = vmatpush1.msra.mxu0 %v328
          %358 = vmatprep.subr.mxu0 %v326
          %359 = vmatpush1.msra.mxu0 %v325
          %360 = vmatprep.subr.mxu0 %v323
          %361 = vmatpush1.msra.mxu0 %v322
          %362 = vmatprep.subr.mxu0 %v320
          %363 = vmatpush1.msra.mxu0 %v319
          %364 = vmatprep.subr.mxu0 %v317
          %365 = vmatpush1.msra.mxu0 %v316
          %366 = vmatprep.subr.mxu0 %v314
          %367 = vmatpush1.msra.mxu0 %v313
          %368 = vmatprep.subr.mxu0 %v311
          %369 = vmatpush1.msra.mxu0 %v310
          %370 = vmatprep.subr.mxu0 %v308
          %371 = vmatpush1.msra.mxu0 %v307
          %372 = vmatprep.subr.mxu0 %v305
          %373 = vmatpush1.msra.mxu0 %v304
          %374 = vmatprep.subr.mxu0 %v302
          %375 = vmatpush1.msra.mxu0 %v301
          %376 = vmatprep.subr.mxu0 %v299
          %377 = vmatpush1.msra.mxu0 %v298
          %378 = vmatprep.subr.mxu0 0.0
          %379 = vmatpush2.msra.mxu0 0.0
          %380 = vmatprep.subr.mxu0 0.0
          %381 = vmatpush2.msra.mxu0 0.0
          %382 = vmatprep.subr.mxu0 0.0
          %383 = vmatpush2.msra.mxu0 0.0
          %384 = vmatprep.subr.mxu0 0.0
          %385 = vmatpush2.msra.mxu0 0.0
          %386 = vmatprep.subr.mxu0 0.0
          %387 = vmatpush2.msra.mxu0 0.0
          %388 = vmatprep.subr.mxu0 0.0
          %389 = vmatpush2.msra.mxu0 0.0
          %390 = vmatprep.subr.mxu0 0.0
          %391 = vmatpush2.msra.mxu0 0.0
          %392 = vmatprep.subr.mxu0 0.0
          %393 = vmatpush2.msra.mxu0 0.0
          %394 = vmatprep.subr.mxu0 0.0
          %395 = vmatpush2.msra.mxu0 0.0
          %396 = vmatprep.subr.mxu0 0.0
          %397 = vmatpush2.msra.mxu0 0.0
          %398 = vmatprep.subr.mxu0 0.0
          %399 = vmatpush2.msra.mxu0 0.0
          %400 = vmatprep.subr.mxu0 0.0
          %401 = vmatpush2.msra.mxu0 0.0
          %402 = vmatprep.subr.mxu0 0.0
          %403 = vmatpush2.msra.mxu0 0.0
          %404 = vmatprep.subr.mxu0 0.0
          %405 = vmatpush2.msra.mxu0 0.0
          %406 = vmatprep.subr.mxu0 0.0
          %407 = vmatpush2.msra.mxu0 0.0
          %408 = vmatprep.subr.mxu0 0.0
          %409 = vmatpush2.msra.mxu0 0.0
          %410 = vmatprep.mubr.f32.mxu0 0.0
          %411 = vmatmul.mubr.f32.gmra.mxu0 %v268
          %v412 = vpop.f32.mrf.mxu0
          %v413 = vadd.f32 0.0, %v412
          %v414 = vpop.f32.mrf.mxu0
          %v415 = vadd.f32 0.0, %v414
          %416 = vmatprep.mubr.f32.mxu0 0.0
          %417 = vmatmul.mubr.f32.gmra.mxu0 %v269
          %v418 = vpop.f32.mrf.mxu0
          %v419 = vadd.f32 0.0, %v418
          %v420 = vpop.f32.mrf.mxu0
          %v421 = vadd.f32 0.0, %v420
          %422 = vmatprep.mubr.f32.mxu0 0.0
          %423 = vmatmul.mubr.f32.gmra.mxu0 %v270
          %v424 = vpop.f32.mrf.mxu0
          %v425 = vadd.f32 0.0, %v424
          %v426 = vpop.f32.mrf.mxu0
          %v427 = vadd.f32 0.0, %v426
          %428 = vmatprep.mubr.f32.mxu0 0.0
          %429 = vmatmul.mubr.f32.gmra.mxu0 %v271
          %v430 = vpop.f32.mrf.mxu0
          %v431 = vadd.f32 0.0, %v430
          %v432 = vpop.f32.mrf.mxu0
          %v433 = vadd.f32 0.0, %v432
          %434 = vmatprep.mubr.f32.mxu0 0.0
          %435 = vmatmul.mubr.f32.gmra.mxu0 %v272
          %v436 = vpop.f32.mrf.mxu0
          %v437 = vadd.f32 0.0, %v436
          %v438 = vpop.f32.mrf.mxu0
          %v439 = vadd.f32 0.0, %v438
          %440 = vmatprep.mubr.f32.mxu0 0.0
          %441 = vmatmul.mubr.f32.gmra.mxu0 %v273
          %v442 = vpop.f32.mrf.mxu0
          %v443 = vadd.f32 0.0, %v442
          %v444 = vpop.f32.mrf.mxu0
          %v445 = vadd.f32 0.0, %v444
          %446 = vmatprep.mubr.f32.mxu0 0.0
          %447 = vmatmul.mubr.f32.gmra.mxu0 %v274
          %v448 = vpop.f32.mrf.mxu0
          %v449 = vadd.f32 0.0, %v448
          %v450 = vpop.f32.mrf.mxu0
          %v451 = vadd.f32 0.0, %v450
          %452 = vmatprep.mubr.f32.mxu0 0.0
          %453 = vmatmul.mubr.f32.gmra.mxu0 %v275
          %v454 = vpop.f32.mrf.mxu0
          %v455 = vadd.f32 0.0, %v454
          %v456 = vpop.f32.mrf.mxu0
          %v457 = vadd.f32 0.0, %v456
          %458 = vdwg.mxu0
          %459 = vmatprep.subr.mxu0 0.0
          %460 = vmatpush1.msra.mxu0 %v345
          %461 = vmatprep.subr.mxu0 0.0
          %462 = vmatpush1.msra.mxu0 %v342
          %463 = vmatprep.subr.mxu0 0.0
          %464 = vmatpush1.msra.mxu0 %v339
          %465 = vmatprep.subr.mxu0 0.0
          %466 = vmatpush1.msra.mxu0 %v336
          %467 = vmatprep.subr.mxu0 0.0
          %468 = vmatpush1.msra.mxu0 %v333
          %469 = vmatprep.subr.mxu0 0.0
          %470 = vmatpush1.msra.mxu0 %v330
          %471 = vmatprep.subr.mxu0 0.0
          %472 = vmatpush1.msra.mxu0 %v327
          %473 = vmatprep.subr.mxu0 0.0
          %474 = vmatpush1.msra.mxu0 %v324
          %475 = vmatprep.subr.mxu0 0.0
          %476 = vmatpush1.msra.mxu0 %v321
          %477 = vmatprep.subr.mxu0 0.0
          %478 = vmatpush1.msra.mxu0 %v318
          %479 = vmatprep.subr.mxu0 0.0
          %480 = vmatpush1.msra.mxu0 %v315
          %481 = vmatprep.subr.mxu0 0.0
          %482 = vmatpush1.msra.mxu0 %v312
          %483 = vmatprep.subr.mxu0 0.0
          %484 = vmatpush1.msra.mxu0 %v309
          %485 = vmatprep.subr.mxu0 0.0
          %486 = vmatpush1.msra.mxu0 %v306
          %487 = vmatprep.subr.mxu0 0.0
          %488 = vmatpush1.msra.mxu0 %v303
          %489 = vmatprep.subr.mxu0 0.0
          %490 = vmatpush1.msra.mxu0 %v300
          %491 = vmatprep.subr.mxu0 0.0
          %492 = vmatpush2.msra.mxu0 0.0
          %493 = vmatprep.subr.mxu0 0.0
          %494 = vmatpush2.msra.mxu0 0.0
          %495 = vmatprep.subr.mxu0 0.0
          %496 = vmatpush2.msra.mxu0 0.0
          %497 = vmatprep.subr.mxu0 0.0
          %498 = vmatpush2.msra.mxu0 0.0
          %499 = vmatprep.subr.mxu0 0.0
          %500 = vmatpush2.msra.mxu0 0.0
          %501 = vmatprep.subr.mxu0 0.0
          %502 = vmatpush2.msra.mxu0 0.0
          %503 = vmatprep.subr.mxu0 0.0
          %504 = vmatpush2.msra.mxu0 0.0
          %505 = vmatprep.subr.mxu0 0.0
          %506 = vmatpush2.msra.mxu0 0.0
          %507 = vmatprep.subr.mxu0 0.0
          %508 = vmatpush2.msra.mxu0 0.0
          %509 = vmatprep.subr.mxu0 0.0
          %510 = vmatpush2.msra.mxu0 0.0
          %511 = vmatprep.subr.mxu0 0.0
          %512 = vmatpush2.msra.mxu0 0.0
          %513 = vmatprep.subr.mxu0 0.0
          %514 = vmatpush2.msra.mxu0 0.0
          %515 = vmatprep.subr.mxu0 0.0
          %516 = vmatpush2.msra.mxu0 0.0
          %517 = vmatprep.subr.mxu0 0.0
          %518 = vmatpush2.msra.mxu0 0.0
          %519 = vmatprep.subr.mxu0 0.0
          %520 = vmatpush2.msra.mxu0 0.0
          %521 = vmatprep.subr.mxu0 0.0
          %522 = vmatpush2.msra.mxu0 0.0
          %523 = vmatprep.mubr.f32.mxu0 0.0
          %524 = vmatmul.mubr.f32.gmra.mxu0 %v268
          %v525 = vpop.f32.mrf.mxu0
          %v526 = vadd.f32 0.0, %v525
          %v527 = vpop.f32.mrf.mxu0
          %528 = vmatprep.mubr.f32.mxu0 0.0
          %529 = vmatmul.mubr.f32.gmra.mxu0 %v269
          %v530 = vpop.f32.mrf.mxu0
          %v531 = vadd.f32 0.0, %v530
          %v532 = vpop.f32.mrf.mxu0
          %533 = vmatprep.mubr.f32.mxu0 0.0
          %534 = vmatmul.mubr.f32.gmra.mxu0 %v270
          %v535 = vpop.f32.mrf.mxu0
          %v536 = vadd.f32 0.0, %v535
          %v537 = vpop.f32.mrf.mxu0
          %538 = vmatprep.mubr.f32.mxu0 0.0
          %539 = vmatmul.mubr.f32.gmra.mxu0 %v271
          %v540 = vpop.f32.mrf.mxu0
          %v541 = vadd.f32 0.0, %v540
          %v542 = vpop.f32.mrf.mxu0
          %543 = vmatprep.mubr.f32.mxu0 0.0
          %544 = vmatmul.mubr.f32.gmra.mxu0 %v272
          %v545 = vpop.f32.mrf.mxu0
          %v546 = vadd.f32 0.0, %v545
          %v547 = vpop.f32.mrf.mxu0
          %548 = vmatprep.mubr.f32.mxu0 0.0
          %549 = vmatmul.mubr.f32.gmra.mxu0 %v273
          %v550 = vpop.f32.mrf.mxu0
          %v551 = vadd.f32 0.0, %v550
          %v552 = vpop.f32.mrf.mxu0
          %553 = vmatprep.mubr.f32.mxu0 0.0
          %554 = vmatmul.mubr.f32.gmra.mxu0 %v274
          %v555 = vpop.f32.mrf.mxu0
          %v556 = vadd.f32 0.0, %v555
          %v557 = vpop.f32.mrf.mxu0
          %558 = vmatprep.mubr.f32.mxu0 0.0
          %559 = vmatmul.mubr.f32.gmra.mxu0 %v275
          %v560 = vpop.f32.mrf.mxu0
          %v561 = vadd.f32 0.0, %v560
          %v562 = vpop.f32.mrf.mxu0
          %563 = vdwg.mxu0
          %s564 = smul.u32 %s27, 2
          %s565 = sadd.s32 %s564, %s28
          %s566 = smul.u32 %s565, 24
          %s567 = smul.addr %s566, 8
          %s568 = scalar_lea.vmem [#allocation6], %s567
          %569 = vst [vmem:[%s568] sm:$0xff] %v413
          %570 = vst [vmem:[%s568 + $0x8] sm:$0xff] %v415
          %571 = vst [vmem:[%s568 + $0x10] sm:$0xff] %v526
          %572 = vst [vmem:[%s568 + $0x18] sm:$0xff] %v419
          %573 = vst [vmem:[%s568 + $0x20] sm:$0xff] %v421
          %574 = vst [vmem:[%s568 + $0x28] sm:$0xff] %v531
          %575 = vst [vmem:[%s568 + $0x30] sm:$0xff] %v425
          %576 = vst [vmem:[%s568 + $0x38] sm:$0xff] %v427
          %577 = vst [vmem:[%s568 + $0x40] sm:$0xff] %v536
          %578 = vst [vmem:[%s568 + $0x48] sm:$0xff] %v431
          %579 = vst [vmem:[%s568 + $0x50] sm:$0xff] %v433
          %580 = vst [vmem:[%s568 + $0x58] sm:$0xff] %v541
          %581 = vst [vmem:[%s568 + $0x60] sm:$0xff] %v437
          %582 = vst [vmem:[%s568 + $0x68] sm:$0xff] %v439
          %583 = vst [vmem:[%s568 + $0x70] sm:$0xff] %v546
          %584 = vst [vmem:[%s568 + $0x78] sm:$0xff] %v443
          %585 = vst [vmem:[%s568 + $0x80] sm:$0xff] %v445
          %586 = vst [vmem:[%s568 + $0x88] sm:$0xff] %v551
          %587 = vst [vmem:[%s568 + $0x90] sm:$0xff] %v449
          %588 = vst [vmem:[%s568 + $0x98] sm:$0xff] %v451
          %589 = vst [vmem:[%s568 + $0xa0] sm:$0xff] %v556
          %590 = vst [vmem:[%s568 + $0xa8] sm:$0xff] %v455
          %591 = vst [vmem:[%s568 + $0xb0] sm:$0xff] %v457
          %592 = vst [vmem:[%s568 + $0xb8] sm:$0xff] %v561
          %v593 = vadd.f32 %v413, 0.0
          %v594 = vadd.f32 %v419, 0.0
          %v595 = vadd.f32 %v425, 0.0
          %v596 = vadd.f32 %v431, 0.0
          %v597 = vadd.f32 %v437, 0.0
          %v598 = vadd.f32 %v443, 0.0
          %v599 = vadd.f32 %v449, 0.0
          %v600 = vadd.f32 %v455, 0.0
          %v601 = vmul.f32 %v413, %v413
          %v602 = vmul.f32 %v419, %v419
          %v603 = vmul.f32 %v425, %v425
          %v604 = vmul.f32 %v431, %v431
          %v605 = vmul.f32 %v437, %v437
          %v606 = vmul.f32 %v443, %v443
          %v607 = vmul.f32 %v449, %v449
          %v608 = vmul.f32 %v455, %v455
          %v609 = vadd.f32 %v601, 0.0
          %v610 = vadd.f32 %v602, 0.0
          %v611 = vadd.f32 %v603, 0.0
          %v612 = vadd.f32 %v604, 0.0
          %v613 = vadd.f32 %v605, 0.0
          %v614 = vadd.f32 %v606, 0.0
          %v615 = vadd.f32 %v607, 0.0
          %v616 = vadd.f32 %v608, 0.0
          %v617 = vadd.f32 %v593, %v415
          %v618 = vadd.f32 %v594, %v421
          %v619 = vadd.f32 %v595, %v427
          %v620 = vadd.f32 %v596, %v433
          %v621 = vadd.f32 %v597, %v439
          %v622 = vadd.f32 %v598, %v445
          %v623 = vadd.f32 %v599, %v451
          %v624 = vadd.f32 %v600, %v457
          %v625 = vmul.f32 %v415, %v415
          %v626 = vmul.f32 %v421, %v421
          %v627 = vmul.f32 %v427, %v427
          %v628 = vmul.f32 %v433, %v433
          %v629 = vmul.f32 %v439, %v439
          %v630 = vmul.f32 %v445, %v445
          %v631 = vmul.f32 %v451, %v451
          %v632 = vmul.f32 %v457, %v457
          %v633 = vadd.f32 %v609, %v625
          %v634 = vadd.f32 %v610, %v626
          %v635 = vadd.f32 %v611, %v627
          %v636 = vadd.f32 %v612, %v628
          %v637 = vadd.f32 %v613, %v629
          %v638 = vadd.f32 %v614, %v630
          %v639 = vadd.f32 %v615, %v631
          %v640 = vadd.f32 %v616, %v632
          %v641 = vadd.f32 %v617, %v526
          %v642 = vadd.f32 %v618, %v531
          %v643 = vadd.f32 %v619, %v536
          %v644 = vadd.f32 %v620, %v541
          %v645 = vadd.f32 %v621, %v546
          %v646 = vadd.f32 %v622, %v551
          %v647 = vadd.f32 %v623, %v556
          %v648 = vadd.f32 %v624, %v561
          %v649 = vmul.f32 %v526, %v526
          %v650 = vmul.f32 %v531, %v531
          %v651 = vmul.f32 %v536, %v536
          %v652 = vmul.f32 %v541, %v541
          %v653 = vmul.f32 %v546, %v546
          %v654 = vmul.f32 %v551, %v551
          %v655 = vmul.f32 %v556, %v556
          %v656 = vmul.f32 %v561, %v561
          %v657 = vadd.f32 %v633, %v649
          %v658 = vadd.f32 %v634, %v650
          %v659 = vadd.f32 %v635, %v651
          %v660 = vadd.f32 %v636, %v652
          %v661 = vadd.f32 %v637, %v653
          %v662 = vadd.f32 %v638, %v654
          %v663 = vadd.f32 %v639, %v655
          %v664 = vadd.f32 %v640, %v656
          %s665 = scalar_lea.vmem %s230, 384 [#allocation7]
          %v666 = vld [vmem:[%s665] sm:$0xff]
          %v667 = vld [vmem:[%s665 + $0x8] sm:$0xff]
          %v668 = vld [vmem:[%s665 + $0x10] sm:$0xff]
          %v669 = vld [vmem:[%s665 + $0x18] sm:$0xff]
          %v670 = vld [vmem:[%s665 + $0x20] sm:$0xff]
          %v671 = vld [vmem:[%s665 + $0x28] sm:$0xff]
          %v672 = vld [vmem:[%s665 + $0x30] sm:$0xff]
          %v673 = vld [vmem:[%s665 + $0x38] sm:$0xff]
          %v674 = vld [vmem:[%s665 + $0x40] sm:$0xff]
          %v675 = vld [vmem:[%s665 + $0x48] sm:$0xff]
          %v676 = vld [vmem:[%s665 + $0x50] sm:$0xff]
          %v677 = vld [vmem:[%s665 + $0x58] sm:$0xff]
          %v678 = vld [vmem:[%s665 + $0x60] sm:$0xff]
          %v679 = vld [vmem:[%s665 + $0x68] sm:$0xff]
          %v680 = vld [vmem:[%s665 + $0x70] sm:$0xff]
          %v681 = vld [vmem:[%s665 + $0x78] sm:$0xff]
          %v682 = vld [vmem:[%s665 + $0x80] sm:$0xff]
          %v683 = vld [vmem:[%s665 + $0x88] sm:$0xff]
          %v684 = vld [vmem:[%s665 + $0x90] sm:$0xff]
          %v685 = vld [vmem:[%s665 + $0x98] sm:$0xff]
          %v686 = vld [vmem:[%s665 + $0xa0] sm:$0xff]
          %v687 = vld [vmem:[%s665 + $0xa8] sm:$0xff]
          %v688 = vld [vmem:[%s665 + $0xb0] sm:$0xff]
          %v689 = vld [vmem:[%s665 + $0xb8] sm:$0xff]
          %v690 = vld [vmem:[%s665 + $0xc0] sm:$0xff]
          %v691 = vld [vmem:[%s665 + $0xc8] sm:$0xff]
          %v692 = vld [vmem:[%s665 + $0xd0] sm:$0xff]
          %v693 = vld [vmem:[%s665 + $0xd8] sm:$0xff]
          %v694 = vld [vmem:[%s665 + $0xe0] sm:$0xff]
          %v695 = vld [vmem:[%s665 + $0xe8] sm:$0xff]
          %v696 = vld [vmem:[%s665 + $0xf0] sm:$0xff]
          %v697 = vld [vmem:[%s665 + $0xf8] sm:$0xff]
          %v698 = vld [vmem:[%s665 + $0x100] sm:$0xff]
          %v699 = vld [vmem:[%s665 + $0x108] sm:$0xff]
          %v700 = vld [vmem:[%s665 + $0x110] sm:$0xff]
          %v701 = vld [vmem:[%s665 + $0x118] sm:$0xff]
          %v702 = vld [vmem:[%s665 + $0x120] sm:$0xff]
          %v703 = vld [vmem:[%s665 + $0x128] sm:$0xff]
          %v704 = vld [vmem:[%s665 + $0x130] sm:$0xff]
          %v705 = vld [vmem:[%s665 + $0x138] sm:$0xff]
          %v706 = vld [vmem:[%s665 + $0x140] sm:$0xff]
          %v707 = vld [vmem:[%s665 + $0x148] sm:$0xff]
          %v708 = vld [vmem:[%s665 + $0x150] sm:$0xff]
          %v709 = vld [vmem:[%s665 + $0x158] sm:$0xff]
          %v710 = vld [vmem:[%s665 + $0x160] sm:$0xff]
          %v711 = vld [vmem:[%s665 + $0x168] sm:$0xff]
          %v712 = vld [vmem:[%s665 + $0x170] sm:$0xff]
          %v713 = vld [vmem:[%s665 + $0x178] sm:$0xff]
          %714 = vmatprep.subr.mxu0 %v712
          %715 = vmatpush1.msra.mxu0 %v711
          %716 = vmatprep.subr.mxu0 %v709
          %717 = vmatpush1.msra.mxu0 %v708
          %718 = vmatprep.subr.mxu0 %v706
          %719 = vmatpush1.msra.mxu0 %v705
          %720 = vmatprep.subr.mxu0 %v703
          %721 = vmatpush1.msra.mxu0 %v702
          %722 = vmatprep.subr.mxu0 %v700
          %723 = vmatpush1.msra.mxu0 %v699
          %724 = vmatprep.subr.mxu0 %v697
          %725 = vmatpush1.msra.mxu0 %v696
          %726 = vmatprep.subr.mxu0 %v694
          %727 = vmatpush1.msra.mxu0 %v693
          %728 = vmatprep.subr.mxu0 %v691
          %729 = vmatpush1.msra.mxu0 %v690
          %730 = vmatprep.subr.mxu0 %v688
          %731 = vmatpush1.msra.mxu0 %v687
          %732 = vmatprep.subr.mxu0 %v685
          %733 = vmatpush1.msra.mxu0 %v684
          %734 = vmatprep.subr.mxu0 %v682
          %735 = vmatpush1.msra.mxu0 %v681
          %736 = vmatprep.subr.mxu0 %v679
          %737 = vmatpush1.msra.mxu0 %v678
          %738 = vmatprep.subr.mxu0 %v676
          %739 = vmatpush1.msra.mxu0 %v675
          %740 = vmatprep.subr.mxu0 %v673
          %741 = vmatpush1.msra.mxu0 %v672
          %742 = vmatprep.subr.mxu0 %v670
          %743 = vmatpush1.msra.mxu0 %v669
          %744 = vmatprep.subr.mxu0 %v667
          %745 = vmatpush1.msra.mxu0 %v666
          %746 = vmatprep.subr.mxu0 0.0
          %747 = vmatpush2.msra.mxu0 0.0
          %748 = vmatprep.subr.mxu0 0.0
          %749 = vmatpush2.msra.mxu0 0.0
          %750 = vmatprep.subr.mxu0 0.0
          %751 = vmatpush2.msra.mxu0 0.0
          %752 = vmatprep.subr.mxu0 0.0
          %753 = vmatpush2.msra.mxu0 0.0
          %754 = vmatprep.subr.mxu0 0.0
          %755 = vmatpush2.msra.mxu0 0.0
          %756 = vmatprep.subr.mxu0 0.0
          %757 = vmatpush2.msra.mxu0 0.0
          %758 = vmatprep.subr.mxu0 0.0
          %759 = vmatpush2.msra.mxu0 0.0
          %760 = vmatprep.subr.mxu0 0.0
          %761 = vmatpush2.msra.mxu0 0.0
          %762 = vmatprep.subr.mxu0 0.0
          %763 = vmatpush2.msra.mxu0 0.0
          %764 = vmatprep.subr.mxu0 0.0
          %765 = vmatpush2.msra.mxu0 0.0
          %766 = vmatprep.subr.mxu0 0.0
          %767 = vmatpush2.msra.mxu0 0.0
          %768 = vmatprep.subr.mxu0 0.0
          %769 = vmatpush2.msra.mxu0 0.0
          %770 = vmatprep.subr.mxu0 0.0
          %771 = vmatpush2.msra.mxu0 0.0
          %772 = vmatprep.subr.mxu0 0.0
          %773 = vmatpush2.msra.mxu0 0.0
          %774 = vmatprep.subr.mxu0 0.0
          %775 = vmatpush2.msra.mxu0 0.0
          %776 = vmatprep.subr.mxu0 0.0
          %777 = vmatpush2.msra.mxu0 0.0
          %778 = vmatprep.mubr.f32.mxu0 0.0
          %779 = vmatmul.mubr.f32.gmra.mxu0 %v268
          %v780 = vpop.f32.mrf.mxu0
          %v781 = vadd.f32 0.0, %v780
          %v782 = vpop.f32.mrf.mxu0
          %v783 = vadd.f32 0.0, %v782
          %784 = vmatprep.mubr.f32.mxu0 0.0
          %785 = vmatmul.mubr.f32.gmra.mxu0 %v269
          %v786 = vpop.f32.mrf.mxu0
          %v787 = vadd.f32 0.0, %v786
          %v788 = vpop.f32.mrf.mxu0
          %v789 = vadd.f32 0.0, %v788
          %790 = vmatprep.mubr.f32.mxu0 0.0
          %791 = vmatmul.mubr.f32.gmra.mxu0 %v270
          %v792 = vpop.f32.mrf.mxu0
          %v793 = vadd.f32 0.0, %v792
          %v794 = vpop.f32.mrf.mxu0
          %v795 = vadd.f32 0.0, %v794
          %796 = vmatprep.mubr.f32.mxu0 0.0
          %797 = vmatmul.mubr.f32.gmra.mxu0 %v271
          %v798 = vpop.f32.mrf.mxu0
          %v799 = vadd.f32 0.0, %v798
          %v800 = vpop.f32.mrf.mxu0
          %v801 = vadd.f32 0.0, %v800
          %802 = vmatprep.mubr.f32.mxu0 0.0
          %803 = vmatmul.mubr.f32.gmra.mxu0 %v272
          %v804 = vpop.f32.mrf.mxu0
          %v805 = vadd.f32 0.0, %v804
          %v806 = vpop.f32.mrf.mxu0
          %v807 = vadd.f32 0.0, %v806
          %808 = vmatprep.mubr.f32.mxu0 0.0
          %809 = vmatmul.mubr.f32.gmra.mxu0 %v273
          %v810 = vpop.f32.mrf.mxu0
          %v811 = vadd.f32 0.0, %v810
          %v812 = vpop.f32.mrf.mxu0
          %v813 = vadd.f32 0.0, %v812
          %814 = vmatprep.mubr.f32.mxu0 0.0
          %815 = vmatmul.mubr.f32.gmra.mxu0 %v274
          %v816 = vpop.f32.mrf.mxu0
          %v817 = vadd.f32 0.0, %v816
          %v818 = vpop.f32.mrf.mxu0
          %v819 = vadd.f32 0.0, %v818
          %820 = vmatprep.mubr.f32.mxu0 0.0
          %821 = vmatmul.mubr.f32.gmra.mxu0 %v275
          %v822 = vpop.f32.mrf.mxu0
          %v823 = vadd.f32 0.0, %v822
          %v824 = vpop.f32.mrf.mxu0
          %v825 = vadd.f32 0.0, %v824
          %826 = vdwg.mxu0
          %827 = vmatprep.subr.mxu0 0.0
          %828 = vmatpush1.msra.mxu0 %v713
          %829 = vmatprep.subr.mxu0 0.0
          %830 = vmatpush1.msra.mxu0 %v710
          %831 = vmatprep.subr.mxu0 0.0
          %832 = vmatpush1.msra.mxu0 %v707
          %833 = vmatprep.subr.mxu0 0.0
          %834 = vmatpush1.msra.mxu0 %v704
          %835 = vmatprep.subr.mxu0 0.0
          %836 = vmatpush1.msra.mxu0 %v701
          %837 = vmatprep.subr.mxu0 0.0
          %838 = vmatpush1.msra.mxu0 %v698
          %839 = vmatprep.subr.mxu0 0.0
          %840 = vmatpush1.msra.mxu0 %v695
          %841 = vmatprep.subr.mxu0 0.0
          %842 = vmatpush1.msra.mxu0 %v692
          %843 = vmatprep.subr.mxu0 0.0
          %844 = vmatpush1.msra.mxu0 %v689
          %845 = vmatprep.subr.mxu0 0.0
          %846 = vmatpush1.msra.mxu0 %v686
          %847 = vmatprep.subr.mxu0 0.0
          %848 = vmatpush1.msra.mxu0 %v683
          %849 = vmatprep.subr.mxu0 0.0
          %850 = vmatpush1.msra.mxu0 %v680
          %851 = vmatprep.subr.mxu0 0.0
          %852 = vmatpush1.msra.mxu0 %v677
          %853 = vmatprep.subr.mxu0 0.0
          %854 = vmatpush1.msra.mxu0 %v674
          %855 = vmatprep.subr.mxu0 0.0
          %856 = vmatpush1.msra.mxu0 %v671
          %857 = vmatprep.subr.mxu0 0.0
          %858 = vmatpush1.msra.mxu0 %v668
          %859 = vmatprep.subr.mxu0 0.0
          %860 = vmatpush2.msra.mxu0 0.0
          %861 = vmatprep.subr.mxu0 0.0
          %862 = vmatpush2.msra.mxu0 0.0
          %863 = vmatprep.subr.mxu0 0.0
          %864 = vmatpush2.msra.mxu0 0.0
          %865 = vmatprep.subr.mxu0 0.0
          %866 = vmatpush2.msra.mxu0 0.0
          %867 = vmatprep.subr.mxu0 0.0
          %868 = vmatpush2.msra.mxu0 0.0
          %869 = vmatprep.subr.mxu0 0.0
          %870 = vmatpush2.msra.mxu0 0.0
          %871 = vmatprep.subr.mxu0 0.0
          %872 = vmatpush2.msra.mxu0 0.0
          %873 = vmatprep.subr.mxu0 0.0
          %874 = vmatpush2.msra.mxu0 0.0
          %875 = vmatprep.subr.mxu0 0.0
          %876 = vmatpush2.msra.mxu0 0.0
          %877 = vmatprep.subr.mxu0 0.0
          %878 = vmatpush2.msra.mxu0 0.0
          %879 = vmatprep.subr.mxu0 0.0
          %880 = vmatpush2.msra.mxu0 0.0
          %881 = vmatprep.subr.mxu0 0.0
          %882 = vmatpush2.msra.mxu0 0.0
          %883 = vmatprep.subr.mxu0 0.0
          %884 = vmatpush2.msra.mxu0 0.0
          %885 = vmatprep.subr.mxu0 0.0
          %886 = vmatpush2.msra.mxu0 0.0
          %887 = vmatprep.subr.mxu0 0.0
          %888 = vmatpush2.msra.mxu0 0.0
          %889 = vmatprep.subr.mxu0 0.0
          %890 = vmatpush2.msra.mxu0 0.0
          %891 = vmatprep.mubr.f32.mxu0 0.0
          %892 = vmatmul.mubr.f32.gmra.mxu0 %v268
          %v893 = vpop.f32.mrf.mxu0
          %v894 = vadd.f32 0.0, %v893
          %v895 = vpop.f32.mrf.mxu0
          %896 = vmatprep.mubr.f32.mxu0 0.0
          %897 = vmatmul.mubr.f32.gmra.mxu0 %v269
          %v898 = vpop.f32.mrf.mxu0
          %v899 = vadd.f32 0.0, %v898
          %v900 = vpop.f32.mrf.mxu0
          %901 = vmatprep.mubr.f32.mxu0 0.0
          %902 = vmatmul.mubr.f32.gmra.mxu0 %v270
          %v903 = vpop.f32.mrf.mxu0
          %v904 = vadd.f32 0.0, %v903
          %v905 = vpop.f32.mrf.mxu0
          %906 = vmatprep.mubr.f32.mxu0 0.0
          %907 = vmatmul.mubr.f32.gmra.mxu0 %v271
          %v908 = vpop.f32.mrf.mxu0
          %v909 = vadd.f32 0.0, %v908
          %v910 = vpop.f32.mrf.mxu0
          %911 = vmatprep.mubr.f32.mxu0 0.0
          %912 = vmatmul.mubr.f32.gmra.mxu0 %v272
          %v913 = vpop.f32.mrf.mxu0
          %v914 = vadd.f32 0.0, %v913
          %v915 = vpop.f32.mrf.mxu0
          %916 = vmatprep.mubr.f32.mxu0 0.0
          %917 = vmatmul.mubr.f32.gmra.mxu0 %v273
          %v918 = vpop.f32.mrf.mxu0
          %v919 = vadd.f32 0.0, %v918
          %v920 = vpop.f32.mrf.mxu0
          %921 = vmatprep.mubr.f32.mxu0 0.0
          %922 = vmatmul.mubr.f32.gmra.mxu0 %v274
          %v923 = vpop.f32.mrf.mxu0
          %v924 = vadd.f32 0.0, %v923
          %v925 = vpop.f32.mrf.mxu0
          %926 = vmatprep.mubr.f32.mxu0 0.0
          %927 = vmatmul.mubr.f32.gmra.mxu0 %v275
          %v928 = vpop.f32.mrf.mxu0
          %v929 = vadd.f32 0.0, %v928
          %v930 = vpop.f32.mrf.mxu0
          %931 = vdwg.mxu0
          %s932 = sadd.s32 %s564, 1
          %s933 = sadd.s32 %s932, %s28
          %s934 = smul.u32 %s933, 24
          %s935 = smul.addr %s934, 8
          %s936 = scalar_lea.vmem [#allocation6], %s935
          %937 = vst [vmem:[%s936] sm:$0xff] %v781
          %938 = vst [vmem:[%s936 + $0x8] sm:$0xff] %v783
          %939 = vst [vmem:[%s936 + $0x10] sm:$0xff] %v894
          %940 = vst [vmem:[%s936 + $0x18] sm:$0xff] %v787
          %941 = vst [vmem:[%s936 + $0x20] sm:$0xff] %v789
          %942 = vst [vmem:[%s936 + $0x28] sm:$0xff] %v899
          %943 = vst [vmem:[%s936 + $0x30] sm:$0xff] %v793
          %944 = vst [vmem:[%s936 + $0x38] sm:$0xff] %v795
          %945 = vst [vmem:[%s936 + $0x40] sm:$0xff] %v904
          %946 = vst [vmem:[%s936 + $0x48] sm:$0xff] %v799
          %947 = vst [vmem:[%s936 + $0x50] sm:$0xff] %v801
          %948 = vst [vmem:[%s936 + $0x58] sm:$0xff] %v909
          %949 = vst [vmem:[%s936 + $0x60] sm:$0xff] %v805
          %950 = vst [vmem:[%s936 + $0x68] sm:$0xff] %v807
          %951 = vst [vmem:[%s936 + $0x70] sm:$0xff] %v914
          %952 = vst [vmem:[%s936 + $0x78] sm:$0xff] %v811
          %953 = vst [vmem:[%s936 + $0x80] sm:$0xff] %v813
          %954 = vst [vmem:[%s936 + $0x88] sm:$0xff] %v919
          %955 = vst [vmem:[%s936 + $0x90] sm:$0xff] %v817
          %956 = vst [vmem:[%s936 + $0x98] sm:$0xff] %v819
          %957 = vst [vmem:[%s936 + $0xa0] sm:$0xff] %v924
          %958 = vst [vmem:[%s936 + $0xa8] sm:$0xff] %v823
          %959 = vst [vmem:[%s936 + $0xb0] sm:$0xff] %v825
          %960 = vst [vmem:[%s936 + $0xb8] sm:$0xff] %v929
          %v961 = vadd.f32 %v641, %v781
          %v962 = vadd.f32 %v642, %v787
          %v963 = vadd.f32 %v643, %v793
          %v964 = vadd.f32 %v644, %v799
          %v965 = vadd.f32 %v645, %v805
          %v966 = vadd.f32 %v646, %v811
          %v967 = vadd.f32 %v647, %v817
          %v968 = vadd.f32 %v648, %v823
          %v969 = vmul.f32 %v781, %v781
          %v970 = vmul.f32 %v787, %v787
          %v971 = vmul.f32 %v793, %v793
          %v972 = vmul.f32 %v799, %v799
          %v973 = vmul.f32 %v805, %v805
          %v974 = vmul.f32 %v811, %v811
          %v975 = vmul.f32 %v817, %v817
          %v976 = vmul.f32 %v823, %v823
          %v977 = vadd.f32 %v657, %v969
          %v978 = vadd.f32 %v658, %v970
          %v979 = vadd.f32 %v659, %v971
          %v980 = vadd.f32 %v660, %v972
          %v981 = vadd.f32 %v661, %v973
          %v982 = vadd.f32 %v662, %v974
          %v983 = vadd.f32 %v663, %v975
          %v984 = vadd.f32 %v664, %v976
          %v985 = vadd.f32 %v961, %v783
          %v986 = vadd.f32 %v962, %v789
          %v987 = vadd.f32 %v963, %v795
          %v988 = vadd.f32 %v964, %v801
          %v989 = vadd.f32 %v965, %v807
          %v990 = vadd.f32 %v966, %v813
          %v991 = vadd.f32 %v967, %v819
          %v992 = vadd.f32 %v968, %v825
          %v993 = vmul.f32 %v783, %v783
          %v994 = vmul.f32 %v789, %v789
          %v995 = vmul.f32 %v795, %v795
          %v996 = vmul.f32 %v801, %v801
          %v997 = vmul.f32 %v807, %v807
          %v998 = vmul.f32 %v813, %v813
          %v999 = vmul.f32 %v819, %v819
          %v1000 = vmul.f32 %v825, %v825
          %v1001 = vadd.f32 %v977, %v993
          %v1002 = vadd.f32 %v978, %v994
          %v1003 = vadd.f32 %v979, %v995
          %v1004 = vadd.f32 %v980, %v996
          %v1005 = vadd.f32 %v981, %v997
          %v1006 = vadd.f32 %v982, %v998
          %v1007 = vadd.f32 %v983, %v999
          %v1008 = vadd.f32 %v984, %v1000
          %v1009 = vadd.f32 %v985, %v894
          %v1010 = vadd.f32 %v986, %v899
          %v1011 = vadd.f32 %v987, %v904
          %v1012 = vadd.f32 %v988, %v909
          %v1013 = vadd.f32 %v989, %v914
          %v1014 = vadd.f32 %v990, %v919
          %v1015 = vadd.f32 %v991, %v924
          %v1016 = vadd.f32 %v992, %v929
          %v1017 = vmul.f32 %v894, %v894
          %v1018 = vmul.f32 %v899, %v899
          %v1019 = vmul.f32 %v904, %v904
          %v1020 = vmul.f32 %v909, %v909
          %v1021 = vmul.f32 %v914, %v914
          %v1022 = vmul.f32 %v919, %v919
          %v1023 = vmul.f32 %v924, %v924
          %v1024 = vmul.f32 %v929, %v929
          %v1025 = vadd.f32 %v1001, %v1017
          %v1026 = vadd.f32 %v1002, %v1018
          %v1027 = vadd.f32 %v1003, %v1019
          %v1028 = vadd.f32 %v1004, %v1020
          %v1029 = vadd.f32 %v1005, %v1021
          %v1030 = vadd.f32 %v1006, %v1022
          %v1031 = vadd.f32 %v1007, %v1023
          %v1032 = vadd.f32 %v1008, %v1024
          %v1033 = vld [vmem:[#allocation2] sm:$0xff]
          %v1034 = vld [vmem:[#allocation2 + $0x8] sm:$0xff]
          %v1035 = vld [vmem:[#allocation2 + $0x10] sm:$0xff]
          %v1036 = vld [vmem:[#allocation2 + $0x18] sm:$0xff]
          %v1037 = vld [vmem:[#allocation2 + $0x20] sm:$0xff]
          %v1038 = vld [vmem:[#allocation2 + $0x28] sm:$0xff]
          %v1039 = vld [vmem:[#allocation2 + $0x30] sm:$0xff]
          %v1040 = vld [vmem:[#allocation2 + $0x38] sm:$0xff]
          %v1041 = vadd.f32 %v1033, %v1009
          %v1042 = vadd.f32 %v1034, %v1010
          %v1043 = vadd.f32 %v1035, %v1011
          %v1044 = vadd.f32 %v1036, %v1012
          %v1045 = vadd.f32 %v1037, %v1013
          %v1046 = vadd.f32 %v1038, %v1014
          %v1047 = vadd.f32 %v1039, %v1015
          %v1048 = vadd.f32 %v1040, %v1016
          %1049 = vst [vmem:[#allocation2] sm:$0xff] %v1041
          %1050 = vst [vmem:[#allocation2 + $0x8] sm:$0xff] %v1042
          %1051 = vst [vmem:[#allocation2 + $0x10] sm:$0xff] %v1043
          %1052 = vst [vmem:[#allocation2 + $0x18] sm:$0xff] %v1044
          %1053 = vst [vmem:[#allocation2 + $0x20] sm:$0xff] %v1045
          %1054 = vst [vmem:[#allocation2 + $0x28] sm:$0xff] %v1046
          %1055 = vst [vmem:[#allocation2 + $0x30] sm:$0xff] %v1047
          %1056 = vst [vmem:[#allocation2 + $0x38] sm:$0xff] %v1048
          %v1057 = vld [vmem:[#allocation3] sm:$0xff]
          %v1058 = vld [vmem:[#allocation3 + $0x8] sm:$0xff]
          %v1059 = vld [vmem:[#allocation3 + $0x10] sm:$0xff]
          %v1060 = vld [vmem:[#allocation3 + $0x18] sm:$0xff]
          %v1061 = vld [vmem:[#allocation3 + $0x20] sm:$0xff]
          %v1062 = vld [vmem:[#allocation3 + $0x28] sm:$0xff]
          %v1063 = vld [vmem:[#allocation3 + $0x30] sm:$0xff]
          %v1064 = vld [vmem:[#allocation3 + $0x38] sm:$0xff]
          %v1065 = vadd.f32 %v1057, %v1025
          %v1066 = vadd.f32 %v1058, %v1026
          %v1067 = vadd.f32 %v1059, %v1027
          %v1068 = vadd.f32 %v1060, %v1028
          %v1069 = vadd.f32 %v1061, %v1029
          %v1070 = vadd.f32 %v1062, %v1030
          %v1071 = vadd.f32 %v1063, %v1031
          %v1072 = vadd.f32 %v1064, %v1032
          %1073 = vst [vmem:[#allocation3] sm:$0xff] %v1065
          %1074 = vst [vmem:[#allocation3 + $0x8] sm:$0xff] %v1066
          %1075 = vst [vmem:[#allocation3 + $0x10] sm:$0xff] %v1067
          %1076 = vst [vmem:[#allocation3 + $0x18] sm:$0xff] %v1068
          %1077 = vst [vmem:[#allocation3 + $0x20] sm:$0xff] %v1069
          %1078 = vst [vmem:[#allocation3 + $0x28] sm:$0xff] %v1070
          %1079 = vst [vmem:[#allocation3 + $0x30] sm:$0xff] %v1071
          %1080 = vst [vmem:[#allocation3 + $0x38] sm:$0xff] %v1072
        $region44: #{tpu_custom_call.1} parent=35 // pred_fallthru
          _
        %p1081 = scmp.eq.s32.totalorder %s26, 1
        // Predicated region
        $region49: #{tpu_custom_call.1} parent=35 // pred_check
          %p1082 = pneg %p1081
        $region50: #{tpu_custom_call.1} parent=35 // pred_check_branch
          %1084 = sbr.rel (%p1082) target = $region52
        $region51: #{tpu_custom_call.1} parent=35 // pred_region
          // Predicated region
          $region53: #{tpu_custom_call.1} parent=51 // pred_check
            _
          $region54: #{tpu_custom_call.1} parent=51 // pred_check_branch
            %1086 = sbr.rel (%p266) target = $region56
          $region55: #{tpu_custom_call.1} parent=51 // pred_region
            %v1087 = vld [vmem:[#allocation2] sm:$0xff]
            %v1088 = vld [vmem:[#allocation2 + $0x8] sm:$0xff]
            %v1089 = vld [vmem:[#allocation2 + $0x10] sm:$0xff]
            %v1090 = vld [vmem:[#allocation2 + $0x18] sm:$0xff]
            %v1091 = vld [vmem:[#allocation2 + $0x20] sm:$0xff]
            %v1092 = vld [vmem:[#allocation2 + $0x28] sm:$0xff]
            %v1093 = vld [vmem:[#allocation2 + $0x30] sm:$0xff]
            %v1094 = vld [vmem:[#allocation2 + $0x38] sm:$0xff]
            %1095 = vadd.xlane.f32.xlu0 %v1087
            %v1096 = vpop.xlane.xlu0 %1095
            %1097 = vadd.xlane.f32.xlu0 %v1088
            %v1098 = vpop.xlane.xlu0 %1097
            %1099 = vadd.xlane.f32.xlu0 %v1089
            %v1100 = vpop.xlane.xlu0 %1099
            %1101 = vadd.xlane.f32.xlu0 %v1090
            %v1102 = vpop.xlane.xlu0 %1101
            %1103 = vadd.xlane.f32.xlu0 %v1091
            %v1104 = vpop.xlane.xlu0 %1103
            %1105 = vadd.xlane.f32.xlu0 %v1092
            %v1106 = vpop.xlane.xlu0 %1105
            %1107 = vadd.xlane.f32.xlu0 %v1093
            %v1108 = vpop.xlane.xlu0 %1107
            %1109 = vadd.xlane.f32.xlu0 %v1094
            %v1110 = vpop.xlane.xlu0 %1109
            %v1111 = vld [vmem:[#allocation3] sm:$0xff]
            %v1112 = vld [vmem:[#allocation3 + $0x8] sm:$0xff]
            %v1113 = vld [vmem:[#allocation3 + $0x10] sm:$0xff]
            %v1114 = vld [vmem:[#allocation3 + $0x18] sm:$0xff]
            %v1115 = vld [vmem:[#allocation3 + $0x20] sm:$0xff]
            %v1116 = vld [vmem:[#allocation3 + $0x28] sm:$0xff]
            %v1117 = vld [vmem:[#allocation3 + $0x30] sm:$0xff]
            %v1118 = vld [vmem:[#allocation3 + $0x38] sm:$0xff]
            %1119 = vadd.xlane.f32.xlu0 %v1111
            %v1120 = vpop.xlane.xlu0 %1119
            %1121 = vadd.xlane.f32.xlu0 %v1112
            %v1122 = vpop.xlane.xlu0 %1121
            %1123 = vadd.xlane.f32.xlu0 %v1113
            %v1124 = vpop.xlane.xlu0 %1123
            %1125 = vadd.xlane.f32.xlu0 %v1114
            %v1126 = vpop.xlane.xlu0 %1125
            %1127 = vadd.xlane.f32.xlu0 %v1115
            %v1128 = vpop.xlane.xlu0 %1127
            %1129 = vadd.xlane.f32.xlu0 %v1116
            %v1130 = vpop.xlane.xlu0 %1129
            %1131 = vadd.xlane.f32.xlu0 %v1117
            %v1132 = vpop.xlane.xlu0 %1131
            %1133 = vadd.xlane.f32.xlu0 %v1118
            %v1134 = vpop.xlane.xlu0 %1133
            %v1135 = vmul.f32 %v1096, 0.0013020834
            %v1136 = vmul.f32 %v1098, 0.0013020834
            %v1137 = vmul.f32 %v1100, 0.0013020834
            %v1138 = vmul.f32 %v1102, 0.0013020834
            %v1139 = vmul.f32 %v1104, 0.0013020834
            %v1140 = vmul.f32 %v1106, 0.0013020834
            %v1141 = vmul.f32 %v1108, 0.0013020834
            %v1142 = vmul.f32 %v1110, 0.0013020834
            %v1143 = vmul.f32 %v1120, 0.0013020834
            %v1144 = vmul.f32 %v1122, 0.0013020834
            %v1145 = vmul.f32 %v1124, 0.0013020834
            %v1146 = vmul.f32 %v1126, 0.0013020834
            %v1147 = vmul.f32 %v1128, 0.0013020834
            %v1148 = vmul.f32 %v1130, 0.0013020834
            %v1149 = vmul.f32 %v1132, 0.0013020834
            %v1150 = vmul.f32 %v1134, 0.0013020834
            %v1151 = vmul.f32 %v1135, %v1135
            %v1152 = vmul.f32 %v1136, %v1136
            %v1153 = vmul.f32 %v1137, %v1137
            %v1154 = vmul.f32 %v1138, %v1138
            %v1155 = vmul.f32 %v1139, %v1139
            %v1156 = vmul.f32 %v1140, %v1140
            %v1157 = vmul.f32 %v1141, %v1141
            %v1158 = vmul.f32 %v1142, %v1142
            %v1159 = vsub.f32 %v1143, %v1151
            %v1160 = vsub.f32 %v1144, %v1152
            %v1161 = vsub.f32 %v1145, %v1153
            %v1162 = vsub.f32 %v1146, %v1154
            %v1163 = vsub.f32 %v1147, %v1155
            %v1164 = vsub.f32 %v1148, %v1156
            %v1165 = vsub.f32 %v1149, %v1157
            %v1166 = vsub.f32 %v1150, %v1158
            %v1167 = vmax.f32 %v1159, 0.0
            %v1168 = vmax.f32 %v1160, 0.0
            %v1169 = vmax.f32 %v1161, 0.0
            %v1170 = vmax.f32 %v1162, 0.0
            %v1171 = vmax.f32 %v1163, 0.0
            %v1172 = vmax.f32 %v1164, 0.0
            %v1173 = vmax.f32 %v1165, 0.0
            %v1174 = vmax.f32 %v1166, 0.0
            %v1175 = vld [vmem:[%s2] sm:$0xff]
            %v1176 = vld [vmem:[%s2 + $0x8] sm:$0xff]
            %v1177 = vld [vmem:[%s2 + $0x10] sm:$0xff]
            %v1178 = vld [vmem:[%s2 + $0x18] sm:$0xff]
            %v1179 = vld [vmem:[%s2 + $0x20] sm:$0xff]
            %v1180 = vld [vmem:[%s2 + $0x28] sm:$0xff]
            %v1181 = vld [vmem:[%s2 + $0x30] sm:$0xff]
            %v1182 = vld [vmem:[%s2 + $0x38] sm:$0xff]
            %v1183 = vadd.f32 %v1167, 1e-05
            %v1184 = vadd.f32 %v1168, 1e-05
            %v1185 = vadd.f32 %v1169, 1e-05
            %v1186 = vadd.f32 %v1170, 1e-05
            %v1187 = vadd.f32 %v1171, 1e-05
            %v1188 = vadd.f32 %v1172, 1e-05
            %v1189 = vadd.f32 %v1173, 1e-05
            %v1190 = vadd.f32 %v1174, 1e-05
            %v1191 = vrsqrt.pop %v1183
            %v1192 = vrsqrt.pop %v1184
            %v1193 = vrsqrt.pop %v1185
            %v1194 = vrsqrt.pop %v1186
            %v1195 = vrsqrt.pop %v1187
            %v1196 = vrsqrt.pop %v1188
            %v1197 = vrsqrt.pop %v1189
            %v1198 = vrsqrt.pop %v1190
            %v1199 = vmul.f32 %v1175, %v1191
            %v1200 = vmul.f32 %v1176, %v1192
            %v1201 = vmul.f32 %v1177, %v1193
            %v1202 = vmul.f32 %v1178, %v1194
            %v1203 = vmul.f32 %v1179, %v1195
            %v1204 = vmul.f32 %v1180, %v1196
            %v1205 = vmul.f32 %v1181, %v1197
            %v1206 = vmul.f32 %v1182, %v1198
            %vm1207 = vcmask 7168
            %1208 = vst.msk [vmem:[#allocation4] sm:$0xff] %vm1207, %v1199
            %1209 = vst.msk [vmem:[#allocation4 + $0x8] sm:$0xff] %vm1207, %v1200
            %1210 = vst.msk [vmem:[#allocation4 + $0x10] sm:$0xff] %vm1207, %v1201
            %1211 = vst.msk [vmem:[#allocation4 + $0x18] sm:$0xff] %vm1207, %v1202
            %1212 = vst.msk [vmem:[#allocation4 + $0x20] sm:$0xff] %vm1207, %v1203
            %1213 = vst.msk [vmem:[#allocation4 + $0x28] sm:$0xff] %vm1207, %v1204
            %1214 = vst.msk [vmem:[#allocation4 + $0x30] sm:$0xff] %vm1207, %v1205
            %1215 = vst.msk [vmem:[#allocation4 + $0x38] sm:$0xff] %vm1207, %v1206
            %v1216 = vld [vmem:[%s3] sm:$0xff]
            %v1217 = vld [vmem:[%s3 + $0x8] sm:$0xff]
            %v1218 = vld [vmem:[%s3 + $0x10] sm:$0xff]
            %v1219 = vld [vmem:[%s3 + $0x18] sm:$0xff]
            %v1220 = vld [vmem:[%s3 + $0x20] sm:$0xff]
            %v1221 = vld [vmem:[%s3 + $0x28] sm:$0xff]
            %v1222 = vld [vmem:[%s3 + $0x30] sm:$0xff]
            %v1223 = vld [vmem:[%s3 + $0x38] sm:$0xff]
            %v1224 = vmul.f32 %v1135, %v1199
            %v1225 = vmul.f32 %v1136, %v1200
            %v1226 = vmul.f32 %v1137, %v1201
            %v1227 = vmul.f32 %v1138, %v1202
            %v1228 = vmul.f32 %v1139, %v1203
            %v1229 = vmul.f32 %v1140, %v1204
            %v1230 = vmul.f32 %v1141, %v1205
            %v1231 = vmul.f32 %v1142, %v1206
            %v1232 = vsub.f32 %v1216, %v1224
            %v1233 = vsub.f32 %v1217, %v1225
            %v1234 = vsub.f32 %v1218, %v1226
            %v1235 = vsub.f32 %v1219, %v1227
            %v1236 = vsub.f32 %v1220, %v1228
            %v1237 = vsub.f32 %v1221, %v1229
            %v1238 = vsub.f32 %v1222, %v1230
            %v1239 = vsub.f32 %v1223, %v1231
            %1240 = vst.msk [vmem:[#allocation5] sm:$0xff] %vm1207, %v1232
            %1241 = vst.msk [vmem:[#allocation5 + $0x8] sm:$0xff] %vm1207, %v1233
            %1242 = vst.msk [vmem:[#allocation5 + $0x10] sm:$0xff] %vm1207, %v1234
            %1243 = vst.msk [vmem:[#allocation5 + $0x18] sm:$0xff] %vm1207, %v1235
            %1244 = vst.msk [vmem:[#allocation5 + $0x20] sm:$0xff] %vm1207, %v1236
            %1245 = vst.msk [vmem:[#allocation5 + $0x28] sm:$0xff] %vm1207, %v1237
            %1246 = vst.msk [vmem:[#allocation5 + $0x30] sm:$0xff] %vm1207, %v1238
            %1247 = vst.msk [vmem:[#allocation5 + $0x38] sm:$0xff] %vm1207, %v1239
          $region56: #{tpu_custom_call.1} parent=51 // pred_fallthru
            _
          %v1248 = vld [vmem:[#allocation4] sm:$0xff]
          %v1249 = vld [vmem:[#allocation4 + $0x8] sm:$0xff]
          %v1250 = vld [vmem:[#allocation4 + $0x10] sm:$0xff]
          %v1251 = vld [vmem:[#allocation4 + $0x18] sm:$0xff]
          %v1252 = vld [vmem:[#allocation4 + $0x20] sm:$0xff]
          %v1253 = vld [vmem:[#allocation4 + $0x28] sm:$0xff]
          %v1254 = vld [vmem:[#allocation4 + $0x30] sm:$0xff]
          %v1255 = vld [vmem:[#allocation4 + $0x38] sm:$0xff]
          %v1256 = vld [vmem:[#allocation5] sm:$0xff]
          %v1257 = vld [vmem:[#allocation5 + $0x8] sm:$0xff]
          %v1258 = vld [vmem:[#allocation5 + $0x10] sm:$0xff]
          %v1259 = vld [vmem:[#allocation5 + $0x18] sm:$0xff]
          %v1260 = vld [vmem:[#allocation5 + $0x20] sm:$0xff]
          %v1261 = vld [vmem:[#allocation5 + $0x28] sm:$0xff]
          %v1262 = vld [vmem:[#allocation5 + $0x30] sm:$0xff]
          %v1263 = vld [vmem:[#allocation5 + $0x38] sm:$0xff]
          %s1264 = smul.u32 %s27, 2
          %s1265 = sadd.s32 %s1264, %s28
          %s1266 = smul.u32 %s1265, 24
          %s1267 = smul.addr %s1266, 8
          %s1268 = scalar_lea.vmem [#allocation6], %s1267
          %v1269 = vld [vmem:[%s1268] sm:$0xff]
          %v1270 = vld [vmem:[%s1268 + $0x8] sm:$0xff]
          %v1271 = vld [vmem:[%s1268 + $0x10] sm:$0xff]
          %v1272 = vld [vmem:[%s1268 + $0x18] sm:$0xff]
          %v1273 = vld [vmem:[%s1268 + $0x20] sm:$0xff]
          %v1274 = vld [vmem:[%s1268 + $0x28] sm:$0xff]
          %v1275 = vld [vmem:[%s1268 + $0x30] sm:$0xff]
          %v1276 = vld [vmem:[%s1268 + $0x38] sm:$0xff]
          %v1277 = vld [vmem:[%s1268 + $0x40] sm:$0xff]
          %v1278 = vld [vmem:[%s1268 + $0x48] sm:$0xff]
          %v1279 = vld [vmem:[%s1268 + $0x50] sm:$0xff]
          %v1280 = vld [vmem:[%s1268 + $0x58] sm:$0xff]
          %v1281 = vld [vmem:[%s1268 + $0x60] sm:$0xff]
          %v1282 = vld [vmem:[%s1268 + $0x68] sm:$0xff]
          %v1283 = vld [vmem:[%s1268 + $0x70] sm:$0xff]
          %v1284 = vld [vmem:[%s1268 + $0x78] sm:$0xff]
          %v1285 = vld [vmem:[%s1268 + $0x80] sm:$0xff]
          %v1286 = vld [vmem:[%s1268 + $0x88] sm:$0xff]
          %v1287 = vld [vmem:[%s1268 + $0x90] sm:$0xff]
          %v1288 = vld [vmem:[%s1268 + $0x98] sm:$0xff]
          %v1289 = vld [vmem:[%s1268 + $0xa0] sm:$0xff]
          %v1290 = vld [vmem:[%s1268 + $0xa8] sm:$0xff]
          %v1291 = vld [vmem:[%s1268 + $0xb0] sm:$0xff]
          %v1292 = vld [vmem:[%s1268 + $0xb8] sm:$0xff]
          %1294 = vset.pattern.permute.xlu0 0
          %1295 = vperm.xlu0 %1294, %v1248
          %v1296 = vpop.permute.xlu0 %1295
          %1299 = vset.pattern.permute.xlu0 0
          %1300 = vperm.xlu0 %1299, %v1249
          %v1301 = vpop.permute.xlu0 %1300
          %1304 = vset.pattern.permute.xlu0 0
          %1305 = vperm.xlu0 %1304, %v1250
          %v1306 = vpop.permute.xlu0 %1305
          %1309 = vset.pattern.permute.xlu0 0
          %1310 = vperm.xlu0 %1309, %v1251
          %v1311 = vpop.permute.xlu0 %1310
          %1314 = vset.pattern.permute.xlu0 0
          %1315 = vperm.xlu0 %1314, %v1252
          %v1316 = vpop.permute.xlu0 %1315
          %1319 = vset.pattern.permute.xlu0 0
          %1320 = vperm.xlu0 %1319, %v1253
          %v1321 = vpop.permute.xlu0 %1320
          %1324 = vset.pattern.permute.xlu0 0
          %1325 = vperm.xlu0 %1324, %v1254
          %v1326 = vpop.permute.xlu0 %1325
          %1329 = vset.pattern.permute.xlu0 0
          %1330 = vperm.xlu0 %1329, %v1255
          %v1331 = vpop.permute.xlu0 %1330
          %v1333 = vmul.f32 %v1269, %v1296
          %v1334 = vmul.f32 %v1270, %v1296
          %v1335 = vmul.f32 %v1271, %v1296
          %v1336 = vmul.f32 %v1272, %v1301
          %v1337 = vmul.f32 %v1273, %v1301
          %v1338 = vmul.f32 %v1274, %v1301
          %v1339 = vmul.f32 %v1275, %v1306
          %v1340 = vmul.f32 %v1276, %v1306
          %v1341 = vmul.f32 %v1277, %v1306
          %v1342 = vmul.f32 %v1278, %v1311
          %v1343 = vmul.f32 %v1279, %v1311
          %v1344 = vmul.f32 %v1280, %v1311
          %v1345 = vmul.f32 %v1281, %v1316
          %v1346 = vmul.f32 %v1282, %v1316
          %v1347 = vmul.f32 %v1283, %v1316
          %v1348 = vmul.f32 %v1284, %v1321
          %v1349 = vmul.f32 %v1285, %v1321
          %v1350 = vmul.f32 %v1286, %v1321
          %v1351 = vmul.f32 %v1287, %v1326
          %v1352 = vmul.f32 %v1288, %v1326
          %v1353 = vmul.f32 %v1289, %v1326
          %v1354 = vmul.f32 %v1290, %v1331
          %v1355 = vmul.f32 %v1291, %v1331
          %v1356 = vmul.f32 %v1292, %v1331
          %1358 = vset.pattern.permute.xlu0 0
          %1359 = vperm.xlu0 %1358, %v1256
          %v1360 = vpop.permute.xlu0 %1359
          %1363 = vset.pattern.permute.xlu0 0
          %1364 = vperm.xlu0 %1363, %v1257
          %v1365 = vpop.permute.xlu0 %1364
          %1368 = vset.pattern.permute.xlu0 0
          %1369 = vperm.xlu0 %1368, %v1258
          %v1370 = vpop.permute.xlu0 %1369
          %1373 = vset.pattern.permute.xlu0 0
          %1374 = vperm.xlu0 %1373, %v1259
          %v1375 = vpop.permute.xlu0 %1374
          %1378 = vset.pattern.permute.xlu0 0
          %1379 = vperm.xlu0 %1378, %v1260
          %v1380 = vpop.permute.xlu0 %1379
          %1383 = vset.pattern.permute.xlu0 0
          %1384 = vperm.xlu0 %1383, %v1261
          %v1385 = vpop.permute.xlu0 %1384
          %1388 = vset.pattern.permute.xlu0 0
          %1389 = vperm.xlu0 %1388, %v1262
          %v1390 = vpop.permute.xlu0 %1389
          %1393 = vset.pattern.permute.xlu0 0
          %1394 = vperm.xlu0 %1393, %v1263
          %v1395 = vpop.permute.xlu0 %1394
          %v1397 = vadd.f32 %v1333, %v1360
          %v1398 = vadd.f32 %v1334, %v1360
          %v1399 = vadd.f32 %v1335, %v1360
          %v1400 = vadd.f32 %v1336, %v1365
          %v1401 = vadd.f32 %v1337, %v1365
          %v1402 = vadd.f32 %v1338, %v1365
          %v1403 = vadd.f32 %v1339, %v1370
          %v1404 = vadd.f32 %v1340, %v1370
          %v1405 = vadd.f32 %v1341, %v1370
          %v1406 = vadd.f32 %v1342, %v1375
          %v1407 = vadd.f32 %v1343, %v1375
          %v1408 = vadd.f32 %v1344, %v1375
          %v1409 = vadd.f32 %v1345, %v1380
          %v1410 = vadd.f32 %v1346, %v1380
          %v1411 = vadd.f32 %v1347, %v1380
          %v1412 = vadd.f32 %v1348, %v1385
          %v1413 = vadd.f32 %v1349, %v1385
          %v1414 = vadd.f32 %v1350, %v1385
          %v1415 = vadd.f32 %v1351, %v1390
          %v1416 = vadd.f32 %v1352, %v1390
          %v1417 = vadd.f32 %v1353, %v1390
          %v1418 = vadd.f32 %v1354, %v1395
          %v1419 = vadd.f32 %v1355, %v1395
          %v1420 = vadd.f32 %v1356, %v1395
          %v1421 = vmax.f32 %v1397, 0.0
          %v1422 = vmax.f32 %v1398, 0.0
          %v1423 = vmax.f32 %v1399, 0.0
          %v1424 = vmax.f32 %v1400, 0.0
          %v1425 = vmax.f32 %v1401, 0.0
          %v1426 = vmax.f32 %v1402, 0.0
          %v1427 = vmax.f32 %v1403, 0.0
          %v1428 = vmax.f32 %v1404, 0.0
          %v1429 = vmax.f32 %v1405, 0.0
          %v1430 = vmax.f32 %v1406, 0.0
          %v1431 = vmax.f32 %v1407, 0.0
          %v1432 = vmax.f32 %v1408, 0.0
          %v1433 = vmax.f32 %v1409, 0.0
          %v1434 = vmax.f32 %v1410, 0.0
          %v1435 = vmax.f32 %v1411, 0.0
          %v1436 = vmax.f32 %v1412, 0.0
          %v1437 = vmax.f32 %v1413, 0.0
          %v1438 = vmax.f32 %v1414, 0.0
          %v1439 = vmax.f32 %v1415, 0.0
          %v1440 = vmax.f32 %v1416, 0.0
          %v1441 = vmax.f32 %v1417, 0.0
          %v1442 = vmax.f32 %v1418, 0.0
          %v1443 = vmax.f32 %v1419, 0.0
          %v1444 = vmax.f32 %v1420, 0.0
          %1445 = vst [vmem:[%s254] sm:$0xff] %v1421
          %1446 = vst [vmem:[%s254 + $0x8] sm:$0xff] %v1422
          %1447 = vst [vmem:[%s254 + $0x10] sm:$0xff] %v1423
          %1448 = vst [vmem:[%s254 + $0x18] sm:$0xff] %v1424
          %1449 = vst [vmem:[%s254 + $0x20] sm:$0xff] %v1425
          %1450 = vst [vmem:[%s254 + $0x28] sm:$0xff] %v1426
          %1451 = vst [vmem:[%s254 + $0x30] sm:$0xff] %v1427
          %1452 = vst [vmem:[%s254 + $0x38] sm:$0xff] %v1428
          %1453 = vst [vmem:[%s254 + $0x40] sm:$0xff] %v1429
          %1454 = vst [vmem:[%s254 + $0x48] sm:$0xff] %v1430
          %1455 = vst [vmem:[%s254 + $0x50] sm:$0xff] %v1431
          %1456 = vst [vmem:[%s254 + $0x58] sm:$0xff] %v1432
          %1457 = vst [vmem:[%s254 + $0x60] sm:$0xff] %v1433
          %1458 = vst [vmem:[%s254 + $0x68] sm:$0xff] %v1434
          %1459 = vst [vmem:[%s254 + $0x70] sm:$0xff] %v1435
          %1460 = vst [vmem:[%s254 + $0x78] sm:$0xff] %v1436
          %1461 = vst [vmem:[%s254 + $0x80] sm:$0xff] %v1437
          %1462 = vst [vmem:[%s254 + $0x88] sm:$0xff] %v1438
          %1463 = vst [vmem:[%s254 + $0x90] sm:$0xff] %v1439
          %1464 = vst [vmem:[%s254 + $0x98] sm:$0xff] %v1440
          %1465 = vst [vmem:[%s254 + $0xa0] sm:$0xff] %v1441
          %1466 = vst [vmem:[%s254 + $0xa8] sm:$0xff] %v1442
          %1467 = vst [vmem:[%s254 + $0xb0] sm:$0xff] %v1443
          %1468 = vst [vmem:[%s254 + $0xb8] sm:$0xff] %v1444
          %s1469 = sadd.s32 %s1264, 1
          %s1470 = sadd.s32 %s1469, %s28
          %s1471 = smul.u32 %s1470, 24
          %s1472 = smul.addr %s1471, 8
          %s1473 = scalar_lea.vmem [#allocation6], %s1472
          %v1474 = vld [vmem:[%s1473] sm:$0xff]
          %v1475 = vld [vmem:[%s1473 + $0x8] sm:$0xff]
          %v1476 = vld [vmem:[%s1473 + $0x10] sm:$0xff]
          %v1477 = vld [vmem:[%s1473 + $0x18] sm:$0xff]
          %v1478 = vld [vmem:[%s1473 + $0x20] sm:$0xff]
          %v1479 = vld [vmem:[%s1473 + $0x28] sm:$0xff]
          %v1480 = vld [vmem:[%s1473 + $0x30] sm:$0xff]
          %v1481 = vld [vmem:[%s1473 + $0x38] sm:$0xff]
          %v1482 = vld [vmem:[%s1473 + $0x40] sm:$0xff]
          %v1483 = vld [vmem:[%s1473 + $0x48] sm:$0xff]
          %v1484 = vld [vmem:[%s1473 + $0x50] sm:$0xff]
          %v1485 = vld [vmem:[%s1473 + $0x58] sm:$0xff]
          %v1486 = vld [vmem:[%s1473 + $0x60] sm:$0xff]
          %v1487 = vld [vmem:[%s1473 + $0x68] sm:$0xff]
          %v1488 = vld [vmem:[%s1473 + $0x70] sm:$0xff]
          %v1489 = vld [vmem:[%s1473 + $0x78] sm:$0xff]
          %v1490 = vld [vmem:[%s1473 + $0x80] sm:$0xff]
          %v1491 = vld [vmem:[%s1473 + $0x88] sm:$0xff]
          %v1492 = vld [vmem:[%s1473 + $0x90] sm:$0xff]
          %v1493 = vld [vmem:[%s1473 + $0x98] sm:$0xff]
          %v1494 = vld [vmem:[%s1473 + $0xa0] sm:$0xff]
          %v1495 = vld [vmem:[%s1473 + $0xa8] sm:$0xff]
          %v1496 = vld [vmem:[%s1473 + $0xb0] sm:$0xff]
          %v1497 = vld [vmem:[%s1473 + $0xb8] sm:$0xff]
          %v1498 = vmul.f32 %v1474, %v1296
          %v1499 = vmul.f32 %v1475, %v1296
          %v1500 = vmul.f32 %v1476, %v1296
          %v1501 = vmul.f32 %v1477, %v1301
          %v1502 = vmul.f32 %v1478, %v1301
          %v1503 = vmul.f32 %v1479, %v1301
          %v1504 = vmul.f32 %v1480, %v1306
          %v1505 = vmul.f32 %v1481, %v1306
          %v1506 = vmul.f32 %v1482, %v1306
          %v1507 = vmul.f32 %v1483, %v1311
          %v1508 = vmul.f32 %v1484, %v1311
          %v1509 = vmul.f32 %v1485, %v1311
          %v1510 = vmul.f32 %v1486, %v1316
          %v1511 = vmul.f32 %v1487, %v1316
          %v1512 = vmul.f32 %v1488, %v1316
          %v1513 = vmul.f32 %v1489, %v1321
          %v1514 = vmul.f32 %v1490, %v1321
          %v1515 = vmul.f32 %v1491, %v1321
          %v1516 = vmul.f32 %v1492, %v1326
          %v1517 = vmul.f32 %v1493, %v1326
          %v1518 = vmul.f32 %v1494, %v1326
          %v1519 = vmul.f32 %v1495, %v1331
          %v1520 = vmul.f32 %v1496, %v1331
          %v1521 = vmul.f32 %v1497, %v1331
          %v1522 = vadd.f32 %v1498, %v1360
          %v1523 = vadd.f32 %v1499, %v1360
          %v1524 = vadd.f32 %v1500, %v1360
          %v1525 = vadd.f32 %v1501, %v1365
          %v1526 = vadd.f32 %v1502, %v1365
          %v1527 = vadd.f32 %v1503, %v1365
          %v1528 = vadd.f32 %v1504, %v1370
          %v1529 = vadd.f32 %v1505, %v1370
          %v1530 = vadd.f32 %v1506, %v1370
          %v1531 = vadd.f32 %v1507, %v1375
          %v1532 = vadd.f32 %v1508, %v1375
          %v1533 = vadd.f32 %v1509, %v1375
          %v1534 = vadd.f32 %v1510, %v1380
          %v1535 = vadd.f32 %v1511, %v1380
          %v1536 = vadd.f32 %v1512, %v1380
          %v1537 = vadd.f32 %v1513, %v1385
          %v1538 = vadd.f32 %v1514, %v1385
          %v1539 = vadd.f32 %v1515, %v1385
          %v1540 = vadd.f32 %v1516, %v1390
          %v1541 = vadd.f32 %v1517, %v1390
          %v1542 = vadd.f32 %v1518, %v1390
          %v1543 = vadd.f32 %v1519, %v1395
          %v1544 = vadd.f32 %v1520, %v1395
          %v1545 = vadd.f32 %v1521, %v1395
          %v1546 = vmax.f32 %v1522, 0.0
          %v1547 = vmax.f32 %v1523, 0.0
          %v1548 = vmax.f32 %v1524, 0.0
          %v1549 = vmax.f32 %v1525, 0.0
          %v1550 = vmax.f32 %v1526, 0.0
          %v1551 = vmax.f32 %v1527, 0.0
          %v1552 = vmax.f32 %v1528, 0.0
          %v1553 = vmax.f32 %v1529, 0.0
          %v1554 = vmax.f32 %v1530, 0.0
          %v1555 = vmax.f32 %v1531, 0.0
          %v1556 = vmax.f32 %v1532, 0.0
          %v1557 = vmax.f32 %v1533, 0.0
          %v1558 = vmax.f32 %v1534, 0.0
          %v1559 = vmax.f32 %v1535, 0.0
          %v1560 = vmax.f32 %v1536, 0.0
          %v1561 = vmax.f32 %v1537, 0.0
          %v1562 = vmax.f32 %v1538, 0.0
          %v1563 = vmax.f32 %v1539, 0.0
          %v1564 = vmax.f32 %v1540, 0.0
          %v1565 = vmax.f32 %v1541, 0.0
          %v1566 = vmax.f32 %v1542, 0.0
          %v1567 = vmax.f32 %v1543, 0.0
          %v1568 = vmax.f32 %v1544, 0.0
          %v1569 = vmax.f32 %v1545, 0.0
          %s1570 = scalar_lea.vmem %s254, 192 [#allocation10]
          %1571 = vst [vmem:[%s1570] sm:$0xff] %v1546
          %1572 = vst [vmem:[%s1570 + $0x8] sm:$0xff] %v1547
          %1573 = vst [vmem:[%s1570 + $0x10] sm:$0xff] %v1548
          %1574 = vst [vmem:[%s1570 + $0x18] sm:$0xff] %v1549
          %1575 = vst [vmem:[%s1570 + $0x20] sm:$0xff] %v1550
          %1576 = vst [vmem:[%s1570 + $0x28] sm:$0xff] %v1551
          %1577 = vst [vmem:[%s1570 + $0x30] sm:$0xff] %v1552
          %1578 = vst [vmem:[%s1570 + $0x38] sm:$0xff] %v1553
          %1579 = vst [vmem:[%s1570 + $0x40] sm:$0xff] %v1554
          %1580 = vst [vmem:[%s1570 + $0x48] sm:$0xff] %v1555
          %1581 = vst [vmem:[%s1570 + $0x50] sm:$0xff] %v1556
          %1582 = vst [vmem:[%s1570 + $0x58] sm:$0xff] %v1557
          %1583 = vst [vmem:[%s1570 + $0x60] sm:$0xff] %v1558
          %1584 = vst [vmem:[%s1570 + $0x68] sm:$0xff] %v1559
          %1585 = vst [vmem:[%s1570 + $0x70] sm:$0xff] %v1560
          %1586 = vst [vmem:[%s1570 + $0x78] sm:$0xff] %v1561
          %1587 = vst [vmem:[%s1570 + $0x80] sm:$0xff] %v1562
          %1588 = vst [vmem:[%s1570 + $0x88] sm:$0xff] %v1563
          %1589 = vst [vmem:[%s1570 + $0x90] sm:$0xff] %v1564
          %1590 = vst [vmem:[%s1570 + $0x98] sm:$0xff] %v1565
          %1591 = vst [vmem:[%s1570 + $0xa0] sm:$0xff] %v1566
          %1592 = vst [vmem:[%s1570 + $0xa8] sm:$0xff] %v1567
          %1593 = vst [vmem:[%s1570 + $0xb0] sm:$0xff] %v1568
          %1594 = vst [vmem:[%s1570 + $0xb8] sm:$0xff] %v1569
        $region52: #{tpu_custom_call.1} parent=35 // pred_fallthru
          _
        %s1595 = sand.u32 %s151, 1
        %s1596 = scalar_lea.sflag [#allocation9], %s1595
        %s1597 = sand.u32 %s151, 1
        %s1598 = smul.addr %s1597, 384
        %s1599 = scalar_lea.vmem [#allocation10], %s1598
        // Predicated region
        $region57: #{tpu_custom_call.1} parent=35 // pred_check
          %p1600 = pneg %p161
        $region58: #{tpu_custom_call.1} parent=35 // pred_check_branch
          %1602 = sbr.rel (%p1600) target = $region60
        $region59: #{tpu_custom_call.1} parent=35 // pred_region
          %s1603 = smul.u32 %s27, %s26
          %s1604 = smul.u32 %s28, %s26
          %s1605 = smul.u32 2, %s1603
          %s1606 = smul.u32 3, %s1604
          %s1608 = ssub.s32 6144, 6144
          %1609 = vsyncadd %s1596, %s1608
          %s1610 = smul.addr %s1605, 24
          %s1611 = sadd.s32 %s1606, %s1610
          %s1612 = smul.addr %s1611, 128
          %s1613 = scalar_lea.hbm %s4, %s1612
          %s1614 = sshll.u32 %s1599, 4
          %s1615 = int_to_ptr.vmem [resolvable:$true] %s1614
          %1620 = dma.vmem_to_hbm [thread:$0]  %s1615, 6144, %s1613, %s1596, 384, 384, 24
        $region60: #{tpu_custom_call.1} parent=35 // pred_fallthru
          _
      $region36: #{tpu_custom_call.1} parent=5 // pred_fallthru
        _
      %p1621 = scmp.le.s32.totalorder 2, %s16
      // Predicated region
      $region61: #{tpu_custom_call.1} parent=5 // pred_check
        %p1622 = pneg %p1621
      $region62: #{tpu_custom_call.1} parent=5 // pred_check_branch
        %1624 = sbr.rel (%p1622) target = $region64
      $region63: #{tpu_custom_call.1} parent=5 // pred_region
        %s1625 = ssub.s32 %s16, 2
        // Predicated region
        $region65: #{tpu_custom_call.1} parent=63 // pred_check
          %p1626 = pneg %p167
        $region66: #{tpu_custom_call.1} parent=63 // pred_check_branch
          %1628 = sbr.rel (%p1626) target = $region68
        $region67: #{tpu_custom_call.1} parent=63 // pred_region
          %s1629 = sand.u32 %s152, 1
          %s1630 = scalar_lea.sflag [#allocation9], %s1629
          %s1631 = sand.u32 %s152, 1
          %s1632 = smul.addr %s1631, 384
          %s1633 = scalar_lea.vmem [#allocation10], %s1632
          %1634 = dma.done %s1630, 6144
        $region68: #{tpu_custom_call.1} parent=63 // pred_fallthru
          _
      $region64: #{tpu_custom_call.1} parent=5 // pred_fallthru
        _
    $region6: #{tpu_custom_call.1} parent=1 // loop_footer
      %s20 = sadd.s32 1, %s16
    $region7: #{tpu_custom_call.1} parent=1 // loop_footer_branch
      %15 = sbr.rel target = $region3
    $region8: #{tpu_custom_call.1} parent=1 // loop_exit
      _
    %1635 = vsyncpa [#allocation8], 1
    %s1636 = scalar_lea.sflag [#allocation8], 1
    %1637 = vsyncpa %s1636, 1
    %1638 = vsyncpa [#allocation9], 1
    %s1639 = scalar_lea.sflag [#allocation9], 1
    %1640 = vsyncpa %s1639, 1

</llo_original>
